<compile_context>
chip_gen: v6e
topology: v6e:2x2x1
jax: 0.10.0
libtpu: 0.0.40
codegen_flags: <defaults>
</compile_context>

<pallas_src>
import functools

import jax
import jax.numpy as jnp
from jax.experimental import pallas as pl
from jax.experimental.pallas import tpu as pltpu

# ---------------- model config (small synthetic CLIP text model) ----------------
VOCAB_SIZE = 100
MAX_LENGTH = 8        # sequence length
HIDDEN = 32           # d_model
NUM_HEADS = 2
HEAD_DIM = HIDDEN // NUM_HEADS
INTERMEDIATE = 128    # mlp hidden (4 * d_model)
NUM_LAYERS = 2
LN_EPS = 1e-5
NEG_INF = float(jnp.finfo(jnp.float32).min)

# Set to jnp.bfloat16 on v6e/v7x for MXU throughput (keeps f32 accumulation); f32 here to
# match the PyTorch reference exactly.
MATMUL_DTYPE = jnp.float32


def _mm(a, b):
    """MXU matmul with f32 accumulation; operands optionally cast to MATMUL_DTYPE."""
    return jnp.dot(a.astype(MATMUL_DTYPE), b.astype(MATMUL_DTYPE),
                   preferred_element_type=jnp.float32)


def _layer_norm(x, gamma, beta):
    mu = jnp.mean(x, axis=-1, keepdims=True)
    xc = x - mu
    var = jnp.mean(xc * xc, axis=-1, keepdims=True)
    return xc * jax.lax.rsqrt(var + LN_EPS) * gamma + beta


# ---------------- fused Pallas kernel: all layers + final LN ----------------
def fused_clip_kernel(x_ref, mask_ref,
                      wq_ref, wk_ref, wv_ref, wo_ref,
                      w1_ref, w2_ref, vec_ref, b1_ref, fln_ref,
                      o_ref, acc_ref, *, num_heads, batch, seq):
    l = pl.program_id(0)

    # Load the embeddings into the VMEM-resident carry at the first layer.
    @pl.when(l == 0)
    def _():
        acc_ref[...] = x_ref[...]

    x = acc_ref[...]                         # (N, D) with N = B*S
    N, D = x.shape
    hd = D // num_heads
    scale = float(hd) ** -0.5

    vec = vec_ref[0]                         # (9, D): ln1_g, ln1_b, ln2_g, ln2_b, bq, bk, bv, bo, b2
    ln1_g, ln1_b = vec[0:1], vec[1:2]
    ln2_g, ln2_b = vec[2:3], vec[3:4]
    bq, bk, bv, bo, b2 = vec[4:5], vec[5:6], vec[6:7], vec[7:8], vec[8:9]
    b1 = b1_ref[0]                           # (1, I)
    causal = mask_ref[...]                   # (S, S), precomputed constant

    # ---- self-attention block ----
    residual = x
    xn = _layer_norm(x, ln1_g, ln1_b)

    attn = jnp.zeros((N, D), jnp.float32)
    for h in range(num_heads):               # static, tiny; per-head weight refs avoid lane slicing
        sl = slice(h * hd, (h + 1) * hd)
        qh = (_mm(xn, wq_ref[0, h]) + bq[:, sl]) * scale      # (N, hd)
        kh = _mm(xn, wk_ref[0, h]) + bk[:, sl]
        vh = _mm(xn, wv_ref[0, h]) + bv[:, sl]

        q3 = qh.reshape(batch, seq, hd)
        k3 = kh.reshape(batch, seq, hd)
        v3 = vh.reshape(batch, seq, hd)

        # batched contraction on the last dim of both operands -> no explicit k.T
        s = jnp.einsum('bqd,bkd->bqk', q3, k3,
                       preferred_element_type=jnp.float32)    # (B, S, S)
        s = s + causal[None, :, :]
        s = s - jnp.max(s, axis=-1, keepdims=True)
        p = jnp.exp(s)
        p = p * pl.reciprocal(jnp.sum(p, axis=-1, keepdims=True), approx=True)
        ctx = jnp.einsum('bqk,bkd->bqd', p, v3,
                         preferred_element_type=jnp.float32)  # (B, S, hd)

        # per-head output projection accumulated directly -> no lane-dim concatenate
        attn = attn + _mm(ctx.reshape(N, hd), wo_ref[0, h])   # (N, D)

    x = residual + attn + bo

    # ---- MLP block ----
    residual = x
    xn2 = _layer_norm(x, ln2_g, ln2_b)
    h1 = _mm(xn2, w1_ref[0]) + b1
    h1 = h1 * jax.nn.sigmoid(1.702 * h1)     # quick_gelu (CLIP hidden_act)
    x = residual + _mm(h1, w2_ref[0]) + b2

    acc_ref[...] = x

    # final LayerNorm fused into the same kernel (last layer only)
    @pl.when(l == pl.num_programs(0) - 1)
    def _():
        o_ref[...] = _layer_norm(x, fln_ref[0:1], fln_ref[1:2])


# ---------------- wrapper ----------------
def _clip_text_transformer(x_flat, causal, params, batch, seq):
    N, D = x_flat.shape
    H, hd, I, L = NUM_HEADS, HEAD_DIM, INTERMEDIATE, NUM_LAYERS

    return pl.pallas_call(
        functools.partial(fused_clip_kernel, num_heads=H, batch=batch, seq=seq),
        out_shape=jax.ShapeDtypeStruct((N, D), jnp.float32),
        grid=(L,),
        in_specs=[
            pl.BlockSpec((N, D), lambda l: (0, 0)),             # embeddings (resident)
            pl.BlockSpec((seq, seq), lambda l: (0, 0)),         # causal mask (resident)
            pl.BlockSpec((1, H, D, hd), lambda l: (l, 0, 0, 0)),  # wq
            pl.BlockSpec((1, H, D, hd), lambda l: (l, 0, 0, 0)),  # wk
            pl.BlockSpec((1, H, D, hd), lambda l: (l, 0, 0, 0)),  # wv
            pl.BlockSpec((1, H, hd, D), lambda l: (l, 0, 0, 0)),  # wo
            pl.BlockSpec((1, D, I), lambda l: (l, 0, 0)),         # w1
            pl.BlockSpec((1, I, D), lambda l: (l, 0, 0)),         # w2
            pl.BlockSpec((1, 9, D), lambda l: (l, 0, 0)),         # packed LN params + D-sized biases
            pl.BlockSpec((1, 1, I), lambda l: (l, 0, 0)),         # b1
            pl.BlockSpec((2, D), lambda l: (0, 0)),               # final LN gamma/beta (resident)
        ],
        out_specs=pl.BlockSpec((N, D), lambda l: (0, 0)),
        scratch_shapes=[pltpu.VMEM((N, D), jnp.float32)],         # activation carry across layers
        compiler_params=pltpu.CompilerParams(
            # layer axis is a serial dependence chain -> "arbitrary".
            # (For v7x megacore at real batch sizes, add a leading batch-block axis marked
            #  "parallel"; unnecessary at this toy size.)
            dimension_semantics=("arbitrary",)),
    )(x_flat, causal,
      params["wq"], params["wk"], params["wv"], params["wo"],
      params["w1"], params["w2"], params["vec_d"], params["b1"],
      params["final_ln"])


@jax.jit
def frozen_clip_embedder_forward(tokens, params):
    """tokens: [B, S] int32 -> last_hidden_state [B, S, HIDDEN] float32."""
    B, S = tokens.shape
    D = HIDDEN

    # embeddings (glue: gather + add) — flattened to (B*S, D) for the fused kernel
    tok_emb = jnp.take(params["token_embedding"], tokens, axis=0)      # (B, S, D)
    pos_emb = params["position_embedding"][:S][None, :, :]             # (1, S, D)
    x = (tok_emb + pos_emb).astype(jnp.float32).reshape(B * S, D)

    # causal mask built once, passed as a small VMEM constant input
    causal = jnp.where(jnp.arange(S)[None, :] > jnp.arange(S)[:, None],
                       NEG_INF, 0.0).astype(jnp.float32)

    out = _clip_text_transformer(x, causal, params, B, S)
    return out.reshape(B, S, D)


# ---------------- deterministic parameter init (layer-stacked layout) ----------------
def init_params(key):
    std = 0.02
    keys = jax.random.split(key, 8)

    def rnd(k, shape):
        return (std * jax.random.normal(k, shape)).astype(jnp.float32)

    L, H, D, hd, I = NUM_LAYERS, NUM_HEADS, HIDDEN, HEAD_DIM, INTERMEDIATE

    # packed per-layer vectors of width D: [ln1_g, ln1_b, ln2_g, ln2_b, bq, bk, bv, bo, b2]
    vec_d = jnp.zeros((L, 9, D), jnp.float32)
    vec_d = vec_d.at[:, 0, :].set(1.0)   # ln1 gamma
    vec_d = vec_d.at[:, 2, :].set(1.0)   # ln2 gamma

    final_ln = jnp.zeros((2, D), jnp.float32).at[0].set(1.0)  # [gamma; beta]

    return {
        "token_embedding": rnd(keys[0], (VOCAB_SIZE, D)),
        "position_embedding": rnd(keys[1], (MAX_LENGTH, D)),
        "wq": rnd(keys[2], (L, H, D, hd)),
        "wk": rnd(keys[3], (L, H, D, hd)),
        "wv": rnd(keys[4], (L, H, D, hd)),
        "wo": rnd(keys[5], (L, H, hd, D)),
        "w1": rnd(keys[6], (L, D, I)),
        "w2": rnd(keys[7], (L, I, D)),
        "vec_d": vec_d,
        "b1": jnp.zeros((L, 1, I), jnp.float32),
        "final_ln": final_ln,
    }


# TODO(synk): tokenizer (text -> input_ids) and HF checkpoint loading have no Pallas
# equivalent; this script takes integer token ids directly (the `else: tokens = text`
# branch of forward()).

if __name__ == "__main__":
    key = jax.random.PRNGKey(0)
    pkey, tkey = jax.random.split(key)
    params = init_params(pkey)

    B = 2
    tokens = jax.random.randint(tkey, (B, MAX_LENGTH), 0, VOCAB_SIZE, dtype=jnp.int32)

    z = frozen_clip_embedder_forward(tokens, params)   # (B, MAX_LENGTH, HIDDEN)
    jax.block_until_ready(z)
    assert z.shape == (B, MAX_LENGTH, HIDDEN) and z.dtype == jnp.float32
    assert bool(jnp.all(jnp.isfinite(z)))
    print("KERNEL_OK")
</pallas_src>

<mosaic_0001>
module attributes {stable_mosaic.version = 11 : i64} {
  func.func @fused_clip_kernel(%arg0: i32, %arg1: memref<16x32xf32, #tpu.memory_space<vmem>>, %arg2: memref<8x8xf32, #tpu.memory_space<vmem>>, %arg3: memref<1x2x32x16xf32, #tpu.memory_space<vmem>>, %arg4: memref<1x2x32x16xf32, #tpu.memory_space<vmem>>, %arg5: memref<1x2x32x16xf32, #tpu.memory_space<vmem>>, %arg6: memref<1x2x16x32xf32, #tpu.memory_space<vmem>>, %arg7: memref<1x32x128xf32, #tpu.memory_space<vmem>>, %arg8: memref<1x128x32xf32, #tpu.memory_space<vmem>>, %arg9: memref<1x9x32xf32, #tpu.memory_space<vmem>>, %arg10: memref<1x1x128xf32, #tpu.memory_space<vmem>>, %arg11: memref<2x32xf32, #tpu.memory_space<vmem>>, %arg12: memref<16x32xf32, #tpu.memory_space<vmem>>, %arg13: memref<16x32xf32, #tpu.memory_space<vmem>>) attributes {dimension_semantics = [#tpu.dimension_semantics<arbitrary>], iteration_bounds = array<i64: 2>, scalar_prefetch = 0 : i64, scratch_operands = 1 : i64, tpu.core_type = #tpu.core_type<tc>, window_params = [{pipeline_mode = #tpu.pipeline_mode<synchronous>, transform_indices = @transform_0, window_bounds = array<i64: 16, 32>}, {pipeline_mode = #tpu.pipeline_mode<synchronous>, transform_indices = @transform_1, window_bounds = array<i64: 8, 8>}, {transform_indices = @transform_2, window_bounds = array<i64: 1, 2, 32, 16>}, {transform_indices = @transform_3, window_bounds = array<i64: 1, 2, 32, 16>}, {transform_indices = @transform_4, window_bounds = array<i64: 1, 2, 32, 16>}, {transform_indices = @transform_5, window_bounds = array<i64: 1, 2, 16, 32>}, {transform_indices = @transform_6, window_bounds = array<i64: 1, 32, 128>}, {transform_indices = @transform_7, window_bounds = array<i64: 1, 128, 32>}, {transform_indices = @transform_8, window_bounds = array<i64: 1, 9, 32>}, {transform_indices = @transform_9, window_bounds = array<i64: 1, 1, 128>}, {pipeline_mode = #tpu.pipeline_mode<synchronous>, transform_indices = @transform_10, window_bounds = array<i64: 2, 32>}, {pipeline_mode = #tpu.pipeline_mode<synchronous>, transform_indices = @transform_11, window_bounds = array<i64: 16, 32>}]} {
    %c0_i32 = arith.constant 0 : i32
    %0 = arith.cmpi eq, %arg0, %c0_i32 : i32
    %1 = arith.extui %0 : i1 to i32
    %c0_i32_0 = arith.constant 0 : i32
    %2 = arith.cmpi ne, %1, %c0_i32_0 : i32
    scf.if %2 {
      %c0_82 = arith.constant 0 : index
      %c0_83 = arith.constant 0 : index
      %171 = vector.load %arg1[%c0_82, %c0_83] : memref<16x32xf32, #tpu.memory_space<vmem>>, vector<16x32xf32>
      %c0_84 = arith.constant 0 : index
      %c0_85 = arith.constant 0 : index
      %172 = vector.load %arg13[%c0_84, %c0_85] : memref<16x32xf32, #tpu.memory_space<vmem>>, vector<16x32xf32>
      tpu.vector_store %arg13[%c0_84, %c0_85], %171 {strides = array<i32>} : memref<16x32xf32, #tpu.memory_space<vmem>>, vector<16x32xf32>,
    } else {
    }
    %c0 = arith.constant 0 : index
    %c0_1 = arith.constant 0 : index
    %3 = vector.load %arg13[%c0, %c0_1] : memref<16x32xf32, #tpu.memory_space<vmem>>, vector<16x32xf32>
    %c0_2 = arith.constant 0 : index
    %c0_3 = arith.constant 0 : index
    %c0_4 = arith.constant 0 : index
    %4 = vector.load %arg9[%c0_2, %c0_3, %c0_4] : memref<1x9x32xf32, #tpu.memory_space<vmem>>, vector<1x9x32xf32>
    %5 = vector.shape_cast %4 : vector<1x9x32xf32> to vector<9x32xf32>
    %6 = vector.extract_strided_slice %5 {offsets = [0, 0], sizes = [1, 32], strides = [1, 1]} : vector<9x32xf32> to vector<1x32xf32>
    %7 = vector.extract_strided_slice %5 {offsets = [1, 0], sizes = [1, 32], strides = [1, 1]} : vector<9x32xf32> to vector<1x32xf32>
    %8 = vector.extract_strided_slice %5 {offsets = [2, 0], sizes = [1, 32], strides = [1, 1]} : vector<9x32xf32> to vector<1x32xf32>
    %9 = vector.extract_strided_slice %5 {offsets = [3, 0], sizes = [1, 32], strides = [1, 1]} : vector<9x32xf32> to vector<1x32xf32>
    %10 = vector.extract_strided_slice %5 {offsets = [4, 0], sizes = [1, 32], strides = [1, 1]} : vector<9x32xf32> to vector<1x32xf32>
    %11 = vector.extract_strided_slice %5 {offsets = [5, 0], sizes = [1, 32], strides = [1, 1]} : vector<9x32xf32> to vector<1x32xf32>
    %12 = vector.extract_strided_slice %5 {offsets = [6, 0], sizes = [1, 32], strides = [1, 1]} : vector<9x32xf32> to vector<1x32xf32>
    %13 = vector.extract_strided_slice %5 {offsets = [7, 0], sizes = [1, 32], strides = [1, 1]} : vector<9x32xf32> to vector<1x32xf32>
    %14 = vector.extract_strided_slice %5 {offsets = [8, 0], sizes = [1, 32], strides = [1, 1]} : vector<9x32xf32> to vector<1x32xf32>
    %c0_5 = arith.constant 0 : index
    %c0_6 = arith.constant 0 : index
    %c0_7 = arith.constant 0 : index
    %15 = vector.load %arg10[%c0_5, %c0_6, %c0_7] : memref<1x1x128xf32, #tpu.memory_space<vmem>>, vector<1x1x128xf32>
    %16 = vector.shape_cast %15 : vector<1x1x128xf32> to vector<1x128xf32>
    %c0_8 = arith.constant 0 : index
    %c0_9 = arith.constant 0 : index
    %17 = vector.load %arg2[%c0_8, %c0_9] : memref<8x8xf32, #tpu.memory_space<vmem>>, vector<8x8xf32>
    %cst = arith.constant dense<0.000000e+00> : vector<16xf32>
    %18 = vector.multi_reduction <add>, %3, %cst [1] : vector<16x32xf32> to vector<16xf32>
    %19 = vector.shape_cast %18 : vector<16xf32> to vector<16x1xf32>
    %cst_10 = arith.constant 3.200000e+01 : f32
    %20 = vector.broadcast %cst_10 : f32 to vector<16x1xf32>
    %21 = arith.divf %19, %20 : vector<16x1xf32>
    %22 = vector.broadcast %21 : vector<16x1xf32> to vector<16x32xf32>
    %23 = arith.subf %3, %22 : vector<16x32xf32>
    %24 = arith.mulf %23, %23 : vector<16x32xf32>
    %cst_11 = arith.constant dense<0.000000e+00> : vector<16xf32>
    %25 = vector.multi_reduction <add>, %24, %cst_11 [1] : vector<16x32xf32> to vector<16xf32>
    %26 = vector.shape_cast %25 : vector<16xf32> to vector<16x1xf32>
    %cst_12 = arith.constant 3.200000e+01 : f32
    %27 = vector.broadcast %cst_12 : f32 to vector<16x1xf32>
    %28 = arith.divf %26, %27 : vector<16x1xf32>
    %cst_13 = arith.constant 9.99999974E-6 : f32
    %29 = vector.broadcast %cst_13 : f32 to vector<16x1xf32>
    %30 = arith.addf %28, %29 : vector<16x1xf32>
    %31 = math.rsqrt %30 : vector<16x1xf32>
    %32 = vector.broadcast %31 : vector<16x1xf32> to vector<16x32xf32>
    %33 = arith.mulf %23, %32 : vector<16x32xf32>
    %34 = vector.broadcast %6 : vector<1x32xf32> to vector<16x32xf32>
    %35 = arith.mulf %33, %34 : vector<16x32xf32>
    %36 = vector.broadcast %7 : vector<1x32xf32> to vector<16x32xf32>
    %37 = arith.addf %35, %36 : vector<16x32xf32>
    %cst_14 = arith.constant 0.000000e+00 : f32
    %38 = vector.broadcast %cst_14 : f32 to vector<16x32xf32>
    %c0_15 = arith.constant 0 : index
    %c0_16 = arith.constant 0 : index
    %c0_17 = arith.constant 0 : index
    %c0_18 = arith.constant 0 : index
    %39 = vector.load %arg3[%c0_15, %c0_16, %c0_17, %c0_18] : memref<1x2x32x16xf32, #tpu.memory_space<vmem>>, vector<1x1x32x16xf32>
    %40 = vector.shape_cast %39 : vector<1x1x32x16xf32> to vector<32x16xf32>
    %cst_19 = arith.constant dense<0.000000e+00> : vector<16x16xf32>
    %41 = tpu.matmul %37, %40, %cst_19 {dimension_numbers = #tpu.dot_dimension_numbers<[1], [0], [0], [1], [0, 0, 1, 1], [], []>} : vector<16x32xf32>, vector<32x16xf32>, vector<16x16xf32> -> vector<16x16xf32>
    %42 = vector.extract_strided_slice %10 {offsets = [0, 0], sizes = [1, 16], strides = [1, 1]} : vector<1x32xf32> to vector<1x16xf32>
    %43 = vector.broadcast %42 : vector<1x16xf32> to vector<16x16xf32>
    %44 = arith.addf %41, %43 : vector<16x16xf32>
    %cst_20 = arith.constant 2.500000e-01 : f32
    %45 = vector.broadcast %cst_20 : f32 to vector<16x16xf32>
    %46 = arith.mulf %44, %45 : vector<16x16xf32>
    %c0_21 = arith.constant 0 : index
    %c0_22 = arith.constant 0 : index
    %c0_23 = arith.constant 0 : index
    %c0_24 = arith.constant 0 : index
    %47 = vector.load %arg4[%c0_21, %c0_22, %c0_23, %c0_24] : memref<1x2x32x16xf32, #tpu.memory_space<vmem>>, vector<1x1x32x16xf32>
    %48 = vector.shape_cast %47 : vector<1x1x32x16xf32> to vector<32x16xf32>
    %cst_25 = arith.constant dense<0.000000e+00> : vector<16x16xf32>
    %49 = tpu.matmul %37, %48, %cst_25 {dimension_numbers = #tpu.dot_dimension_numbers<[1], [0], [0], [1], [0, 0, 1, 1], [], []>} : vector<16x32xf32>, vector<32x16xf32>, vector<16x16xf32> -> vector<16x16xf32>
    %50 = vector.extract_strided_slice %11 {offsets = [0, 0], sizes = [1, 16], strides = [1, 1]} : vector<1x32xf32> to vector<1x16xf32>
    %51 = vector.broadcast %50 : vector<1x16xf32> to vector<16x16xf32>
    %52 = arith.addf %49, %51 : vector<16x16xf32>
    %c0_26 = arith.constant 0 : index
    %c0_27 = arith.constant 0 : index
    %c0_28 = arith.constant 0 : index
    %c0_29 = arith.constant 0 : index
    %53 = vector.load %arg5[%c0_26, %c0_27, %c0_28, %c0_29] : memref<1x2x32x16xf32, #tpu.memory_space<vmem>>, vector<1x1x32x16xf32>
    %54 = vector.shape_cast %53 : vector<1x1x32x16xf32> to vector<32x16xf32>
    %cst_30 = arith.constant dense<0.000000e+00> : vector<16x16xf32>
    %55 = tpu.matmul %37, %54, %cst_30 {dimension_numbers = #tpu.dot_dimension_numbers<[1], [0], [0], [1], [0, 0, 1, 1], [], []>} : vector<16x32xf32>, vector<32x16xf32>, vector<16x16xf32> -> vector<16x16xf32>
    %56 = vector.extract_strided_slice %12 {offsets = [0, 0], sizes = [1, 16], strides = [1, 1]} : vector<1x32xf32> to vector<1x16xf32>
    %57 = vector.broadcast %56 : vector<1x16xf32> to vector<16x16xf32>
    %58 = arith.addf %55, %57 : vector<16x16xf32>
    %59 = vector.shape_cast %46 : vector<16x16xf32> to vector<2x8x16xf32>
    %60 = vector.shape_cast %52 : vector<16x16xf32> to vector<2x8x16xf32>
    %61 = vector.shape_cast %58 : vector<16x16xf32> to vector<2x8x16xf32>
    "tpu.trace_start"() <{level = 10 : i32, message = "bqd,bkd->bqk"}> : () -> ()
    %cst_31 = arith.constant dense<0.000000e+00> : vector<2x8x8xf32>
    %62 = tpu.matmul %59, %60, %cst_31 {dimension_numbers = #tpu.dot_dimension_numbers<[2], [2], [1], [1], [0, 0, 0, 1, 1, 1], [0], [0]>} : vector<2x8x16xf32>, vector<2x8x16xf32>, vector<2x8x8xf32> -> vector<2x8x8xf32>
    "tpu.trace_stop"() : () -> ()
    %63 = vector.shape_cast %17 : vector<8x8xf32> to vector<1x8x8xf32>
    %64 = vector.broadcast %63 : vector<1x8x8xf32> to vector<2x8x8xf32>
    %65 = arith.addf %62, %64 : vector<2x8x8xf32>
    %cst_32 = arith.constant dense<0xFF800000> : vector<2x8xf32>
    %66 = vector.multi_reduction <maximumf>, %65, %cst_32 [2] : vector<2x8x8xf32> to vector<2x8xf32>
    %67 = vector.shape_cast %66 : vector<2x8xf32> to vector<2x8x1xf32>
    %68 = vector.broadcast %67 : vector<2x8x1xf32> to vector<2x8x8xf32>
    %69 = arith.subf %65, %68 : vector<2x8x8xf32>
    %70 = math.exp %69 : vector<2x8x8xf32>
    %cst_33 = arith.constant dense<0.000000e+00> : vector<2x8xf32>
    %71 = vector.multi_reduction <add>, %70, %cst_33 [2] : vector<2x8x8xf32> to vector<2x8xf32>
    %72 = vector.shape_cast %71 : vector<2x8xf32> to vector<2x8x1xf32>
    %73 = tpu.reciprocal %72 {approx = true} : vector<2x8x1xf32> -> vector<2x8x1xf32>
    %74 = vector.broadcast %73 : vector<2x8x1xf32> to vector<2x8x8xf32>
    %75 = arith.mulf %70, %74 : vector<2x8x8xf32>
    "tpu.trace_start"() <{level = 10 : i32, message = "bqk,bkd->bqd"}> : () -> ()
    %cst_34 = arith.constant dense<0.000000e+00> : vector<2x8x16xf32>
    %76 = tpu.matmul %75, %61, %cst_34 {dimension_numbers = #tpu.dot_dimension_numbers<[2], [1], [1], [2], [0, 0, 0, 1, 1, 2], [0], [0]>} : vector<2x8x8xf32>, vector<2x8x16xf32>, vector<2x8x16xf32> -> vector<2x8x16xf32>
    "tpu.trace_stop"() : () -> ()
    %77 = vector.shape_cast %76 : vector<2x8x16xf32> to vector<16x16xf32>
    %c0_35 = arith.constant 0 : index
    %c0_36 = arith.constant 0 : index
    %c0_37 = arith.constant 0 : index
    %c0_38 = arith.constant 0 : index
    %78 = vector.load %arg6[%c0_35, %c0_36, %c0_37, %c0_38] : memref<1x2x16x32xf32, #tpu.memory_space<vmem>>, vector<1x1x16x32xf32>
    %79 = vector.shape_cast %78 : vector<1x1x16x32xf32> to vector<16x32xf32>
    %cst_39 = arith.constant dense<0.000000e+00> : vector<16x32xf32>
    %80 = tpu.matmul %77, %79, %cst_39 {dimension_numbers = #tpu.dot_dimension_numbers<[1], [0], [0], [1], [0, 0, 1, 1], [], []>} : vector<16x16xf32>, vector<16x32xf32>, vector<16x32xf32> -> vector<16x32xf32>
    %81 = arith.addf %38, %80 : vector<16x32xf32>
    %c0_40 = arith.constant 0 : index
    %c1 = arith.constant 1 : index
    %c0_41 = arith.constant 0 : index
    %c0_42 = arith.constant 0 : index
    %82 = vector.load %arg3[%c0_40, %c1, %c0_41, %c0_42] : memref<1x2x32x16xf32, #tpu.memory_space<vmem>>, vector<1x1x32x16xf32>
    %83 = vector.shape_cast %82 : vector<1x1x32x16xf32> to vector<32x16xf32>
    %cst_43 = arith.constant dense<0.000000e+00> : vector<16x16xf32>
    %84 = tpu.matmul %37, %83, %cst_43 {dimension_numbers = #tpu.dot_dimension_numbers<[1], [0], [0], [1], [0, 0, 1, 1], [], []>} : vector<16x32xf32>, vector<32x16xf32>, vector<16x16xf32> -> vector<16x16xf32>
    %85 = vector.extract_strided_slice %10 {offsets = [0, 16], sizes = [1, 16], strides = [1, 1]} : vector<1x32xf32> to vector<1x16xf32>
    %86 = vector.broadcast %85 : vector<1x16xf32> to vector<16x16xf32>
    %87 = arith.addf %84, %86 : vector<16x16xf32>
    %cst_44 = arith.constant 2.500000e-01 : f32
    %88 = vector.broadcast %cst_44 : f32 to vector<16x16xf32>
    %89 = arith.mulf %87, %88 : vector<16x16xf32>
    %c0_45 = arith.constant 0 : index
    %c1_46 = arith.constant 1 : index
    %c0_47 = arith.constant 0 : index
    %c0_48 = arith.constant 0 : index
    %90 = vector.load %arg4[%c0_45, %c1_46, %c0_47, %c0_48] : memref<1x2x32x16xf32, #tpu.memory_space<vmem>>, vector<1x1x32x16xf32>
    %91 = vector.shape_cast %90 : vector<1x1x32x16xf32> to vector<32x16xf32>
    %cst_49 = arith.constant dense<0.000000e+00> : vector<16x16xf32>
    %92 = tpu.matmul %37, %91, %cst_49 {dimension_numbers = #tpu.dot_dimension_numbers<[1], [0], [0], [1], [0, 0, 1, 1], [], []>} : vector<16x32xf32>, vector<32x16xf32>, vector<16x16xf32> -> vector<16x16xf32>
    %93 = vector.extract_strided_slice %11 {offsets = [0, 16], sizes = [1, 16], strides = [1, 1]} : vector<1x32xf32> to vector<1x16xf32>
    %94 = vector.broadcast %93 : vector<1x16xf32> to vector<16x16xf32>
    %95 = arith.addf %92, %94 : vector<16x16xf32>
    %c0_50 = arith.constant 0 : index
    %c1_51 = arith.constant 1 : index
    %c0_52 = arith.constant 0 : index
    %c0_53 = arith.constant 0 : index
    %96 = vector.load %arg5[%c0_50, %c1_51, %c0_52, %c0_53] : memref<1x2x32x16xf32, #tpu.memory_space<vmem>>, vector<1x1x32x16xf32>
    %97 = vector.shape_cast %96 : vector<1x1x32x16xf32> to vector<32x16xf32>
    %cst_54 = arith.constant dense<0.000000e+00> : vector<16x16xf32>
    %98 = tpu.matmul %37, %97, %cst_54 {dimension_numbers = #tpu.dot_dimension_numbers<[1], [0], [0], [1], [0, 0, 1, 1], [], []>} : vector<16x32xf32>, vector<32x16xf32>, vector<16x16xf32> -> vector<16x16xf32>
    %99 = vector.extract_strided_slice %12 {offsets = [0, 16], sizes = [1, 16], strides = [1, 1]} : vector<1x32xf32> to vector<1x16xf32>
    %100 = vector.broadcast %99 : vector<1x16xf32> to vector<16x16xf32>
    %101 = arith.addf %98, %100 : vector<16x16xf32>
    %102 = vector.shape_cast %89 : vector<16x16xf32> to vector<2x8x16xf32>
    %103 = vector.shape_cast %95 : vector<16x16xf32> to vector<2x8x16xf32>
    %104 = vector.shape_cast %101 : vector<16x16xf32> to vector<2x8x16xf32>
    "tpu.trace_start"() <{level = 10 : i32, message = "bqd,bkd->bqk"}> : () -> ()
    %cst_55 = arith.constant dense<0.000000e+00> : vector<2x8x8xf32>
    %105 = tpu.matmul %102, %103, %cst_55 {dimension_numbers = #tpu.dot_dimension_numbers<[2], [2], [1], [1], [0, 0, 0, 1, 1, 1], [0], [0]>} : vector<2x8x16xf32>, vector<2x8x16xf32>, vector<2x8x8xf32> -> vector<2x8x8xf32>
    "tpu.trace_stop"() : () -> ()
    %106 = vector.shape_cast %17 : vector<8x8xf32> to vector<1x8x8xf32>
    %107 = vector.broadcast %106 : vector<1x8x8xf32> to vector<2x8x8xf32>
    %108 = arith.addf %105, %107 : vector<2x8x8xf32>
    %cst_56 = arith.constant dense<0xFF800000> : vector<2x8xf32>
    %109 = vector.multi_reduction <maximumf>, %108, %cst_56 [2] : vector<2x8x8xf32> to vector<2x8xf32>
    %110 = vector.shape_cast %109 : vector<2x8xf32> to vector<2x8x1xf32>
    %111 = vector.broadcast %110 : vector<2x8x1xf32> to vector<2x8x8xf32>
    %112 = arith.subf %108, %111 : vector<2x8x8xf32>
    %113 = math.exp %112 : vector<2x8x8xf32>
    %cst_57 = arith.constant dense<0.000000e+00> : vector<2x8xf32>
    %114 = vector.multi_reduction <add>, %113, %cst_57 [2] : vector<2x8x8xf32> to vector<2x8xf32>
    %115 = vector.shape_cast %114 : vector<2x8xf32> to vector<2x8x1xf32>
    %116 = tpu.reciprocal %115 {approx = true} : vector<2x8x1xf32> -> vector<2x8x1xf32>
    %117 = vector.broadcast %116 : vector<2x8x1xf32> to vector<2x8x8xf32>
    %118 = arith.mulf %113, %117 : vector<2x8x8xf32>
    "tpu.trace_start"() <{level = 10 : i32, message = "bqk,bkd->bqd"}> : () -> ()
    %cst_58 = arith.constant dense<0.000000e+00> : vector<2x8x16xf32>
    %119 = tpu.matmul %118, %104, %cst_58 {dimension_numbers = #tpu.dot_dimension_numbers<[2], [1], [1], [2], [0, 0, 0, 1, 1, 2], [0], [0]>} : vector<2x8x8xf32>, vector<2x8x16xf32>, vector<2x8x16xf32> -> vector<2x8x16xf32>
    "tpu.trace_stop"() : () -> ()
    %120 = vector.shape_cast %119 : vector<2x8x16xf32> to vector<16x16xf32>
    %c0_59 = arith.constant 0 : index
    %c1_60 = arith.constant 1 : index
    %c0_61 = arith.constant 0 : index
    %c0_62 = arith.constant 0 : index
    %121 = vector.load %arg6[%c0_59, %c1_60, %c0_61, %c0_62] : memref<1x2x16x32xf32, #tpu.memory_space<vmem>>, vector<1x1x16x32xf32>
    %122 = vector.shape_cast %121 : vector<1x1x16x32xf32> to vector<16x32xf32>
    %cst_63 = arith.constant dense<0.000000e+00> : vector<16x32xf32>
    %123 = tpu.matmul %120, %122, %cst_63 {dimension_numbers = #tpu.dot_dimension_numbers<[1], [0], [0], [1], [0, 0, 1, 1], [], []>} : vector<16x16xf32>, vector<16x32xf32>, vector<16x32xf32> -> vector<16x32xf32>
    %124 = arith.addf %81, %123 : vector<16x32xf32>
    %125 = arith.addf %3, %124 : vector<16x32xf32>
    %126 = vector.broadcast %13 : vector<1x32xf32> to vector<16x32xf32>
    %127 = arith.addf %125, %126 : vector<16x32xf32>
    %cst_64 = arith.constant dense<0.000000e+00> : vector<16xf32>
    %128 = vector.multi_reduction <add>, %127, %cst_64 [1] : vector<16x32xf32> to vector<16xf32>
    %129 = vector.shape_cast %128 : vector<16xf32> to vector<16x1xf32>
    %cst_65 = arith.constant 3.200000e+01 : f32
    %130 = vector.broadcast %cst_65 : f32 to vector<16x1xf32>
    %131 = arith.divf %129, %130 : vector<16x1xf32>
    %132 = vector.broadcast %131 : vector<16x1xf32> to vector<16x32xf32>
    %133 = arith.subf %127, %132 : vector<16x32xf32>
    %134 = arith.mulf %133, %133 : vector<16x32xf32>
    %cst_66 = arith.constant dense<0.000000e+00> : vector<16xf32>
    %135 = vector.multi_reduction <add>, %134, %cst_66 [1] : vector<16x32xf32> to vector<16xf32>
    %136 = vector.shape_cast %135 : vector<16xf32> to vector<16x1xf32>
    %cst_67 = arith.constant 3.200000e+01 : f32
    %137 = vector.broadcast %cst_67 : f32 to vector<16x1xf32>
    %138 = arith.divf %136, %137 : vector<16x1xf32>
    %cst_68 = arith.constant 9.99999974E-6 : f32
    %139 = vector.broadcast %cst_68 : f32 to vector<16x1xf32>
    %140 = arith.addf %138, %139 : vector<16x1xf32>
    %141 = math.rsqrt %140 : vector<16x1xf32>
    %142 = vector.broadcast %141 : vector<16x1xf32> to vector<16x32xf32>
    %143 = arith.mulf %133, %142 : vector<16x32xf32>
    %144 = vector.broadcast %8 : vector<1x32xf32> to vector<16x32xf32>
    %145 = arith.mulf %143, %144 : vector<16x32xf32>
    %146 = vector.broadcast %9 : vector<1x32xf32> to vector<16x32xf32>
    %147 = arith.addf %145, %146 : vector<16x32xf32>
    %c0_69 = arith.constant 0 : index
    %c0_70 = arith.constant 0 : index
    %c0_71 = arith.constant 0 : index
    %148 = vector.load %arg7[%c0_69, %c0_70, %c0_71] : memref<1x32x128xf32, #tpu.memory_space<vmem>>, vector<1x32x128xf32>
    %149 = vector.shape_cast %148 : vector<1x32x128xf32> to vector<32x128xf32>
    %cst_72 = arith.constant dense<0.000000e+00> : vector<16x128xf32>
    %150 = tpu.matmul %147, %149, %cst_72 {dimension_numbers = #tpu.dot_dimension_numbers<[1], [0], [0], [1], [0, 0, 1, 1], [], []>} : vector<16x32xf32>, vector<32x128xf32>, vector<16x128xf32> -> vector<16x128xf32>
    %151 = vector.broadcast %16 : vector<1x128xf32> to vector<16x128xf32>
    %152 = arith.addf %150, %151 : vector<16x128xf32>
    %cst_73 = arith.constant 1.702000e+00 : f32
    %153 = vector.broadcast %cst_73 : f32 to vector<16x128xf32>
    %154 = arith.mulf %153, %152 : vector<16x128xf32>
    %155 = arith.negf %154 : vector<16x128xf32>
    %156 = math.exp %155 : vector<16x128xf32>
    %cst_74 = arith.constant 1.000000e+00 : f32
    %157 = vector.broadcast %cst_74 : f32 to vector<16x128xf32>
    %158 = arith.addf %157, %156 : vector<16x128xf32>
    %159 = arith.divf %157, %158 : vector<16x128xf32>
    %160 = arith.mulf %152, %159 : vector<16x128xf32>
    %c0_75 = arith.constant 0 : index
    %c0_76 = arith.constant 0 : index
    %c0_77 = arith.constant 0 : index
    %161 = vector.load %arg8[%c0_75, %c0_76, %c0_77] : memref<1x128x32xf32, #tpu.memory_space<vmem>>, vector<1x128x32xf32>
    %162 = vector.shape_cast %161 : vector<1x128x32xf32> to vector<128x32xf32>
    %cst_78 = arith.constant dense<0.000000e+00> : vector<16x32xf32>
    %163 = tpu.matmul %160, %162, %cst_78 {dimension_numbers = #tpu.dot_dimension_numbers<[1], [0], [0], [1], [0, 0, 1, 1], [], []>} : vector<16x128xf32>, vector<128x32xf32>, vector<16x32xf32> -> vector<16x32xf32>
    %164 = arith.addf %127, %163 : vector<16x32xf32>
    %165 = vector.broadcast %14 : vector<1x32xf32> to vector<16x32xf32>
    %166 = arith.addf %164, %165 : vector<16x32xf32>
    %c0_79 = arith.constant 0 : index
    %c0_80 = arith.constant 0 : index
    %167 = vector.load %arg13[%c0_79, %c0_80] : memref<16x32xf32, #tpu.memory_space<vmem>>, vector<16x32xf32>
    tpu.vector_store %arg13[%c0_79, %c0_80], %166 {strides = array<i32>} : memref<16x32xf32, #tpu.memory_space<vmem>>, vector<16x32xf32>,
    %c1_i32 = arith.constant 1 : i32
    %168 = arith.cmpi eq, %arg0, %c1_i32 : i32
    %169 = arith.extui %168 : i1 to i32
    %c0_i32_81 = arith.constant 0 : i32
    %170 = arith.cmpi ne, %169, %c0_i32_81 : i32
    scf.if %170 {
      %c0_82 = arith.constant 0 : index
      %c0_83 = arith.constant 0 : index
      %171 = vector.load %arg11[%c0_82, %c0_83] : memref<2x32xf32, #tpu.memory_space<vmem>>, vector<1x32xf32>
      %c1_84 = arith.constant 1 : index
      %c0_85 = arith.constant 0 : index
      %172 = vector.load %arg11[%c1_84, %c0_85] : memref<2x32xf32, #tpu.memory_space<vmem>>, vector<1x32xf32>
      %cst_86 = arith.constant dense<0.000000e+00> : vector<16xf32>
      %173 = vector.multi_reduction <add>, %166, %cst_86 [1] : vector<16x32xf32> to vector<16xf32>
      %174 = vector.shape_cast %173 : vector<16xf32> to vector<16x1xf32>
      %cst_87 = arith.constant 3.200000e+01 : f32
      %175 = vector.broadcast %cst_87 : f32 to vector<16x1xf32>
      %176 = arith.divf %174, %175 : vector<16x1xf32>
      %177 = vector.broadcast %176 : vector<16x1xf32> to vector<16x32xf32>
      %178 = arith.subf %166, %177 : vector<16x32xf32>
      %179 = arith.mulf %178, %178 : vector<16x32xf32>
      %cst_88 = arith.constant dense<0.000000e+00> : vector<16xf32>
      %180 = vector.multi_reduction <add>, %179, %cst_88 [1] : vector<16x32xf32> to vector<16xf32>
      %181 = vector.shape_cast %180 : vector<16xf32> to vector<16x1xf32>
      %cst_89 = arith.constant 3.200000e+01 : f32
      %182 = vector.broadcast %cst_89 : f32 to vector<16x1xf32>
      %183 = arith.divf %181, %182 : vector<16x1xf32>
      %cst_90 = arith.constant 9.99999974E-6 : f32
      %184 = vector.broadcast %cst_90 : f32 to vector<16x1xf32>
      %185 = arith.addf %183, %184 : vector<16x1xf32>
      %186 = math.rsqrt %185 : vector<16x1xf32>
      %187 = vector.broadcast %186 : vector<16x1xf32> to vector<16x32xf32>
      %188 = arith.mulf %178, %187 : vector<16x32xf32>
      %189 = vector.broadcast %171 : vector<1x32xf32> to vector<16x32xf32>
      %190 = arith.mulf %188, %189 : vector<16x32xf32>
      %191 = vector.broadcast %172 : vector<1x32xf32> to vector<16x32xf32>
      %192 = arith.addf %190, %191 : vector<16x32xf32>
      %c0_91 = arith.constant 0 : index
      %c0_92 = arith.constant 0 : index
      %193 = vector.load %arg12[%c0_91, %c0_92] : memref<16x32xf32, #tpu.memory_space<vmem>>, vector<16x32xf32>
      tpu.vector_store %arg12[%c0_91, %c0_92], %192 {strides = array<i32>} : memref<16x32xf32, #tpu.memory_space<vmem>>, vector<16x32xf32>,
    } else {
    }
    return
  }
  func.func @transform_0(%arg0: i32) -> (i32, i32) {
    %c0_i32 = arith.constant 0 : i32
    %c0_i32_0 = arith.constant 0 : i32
    %c0_i32_1 = arith.constant 0 : i32
    return %c0_i32, %c0_i32_0 : i32, i32
  }
  func.func @transform_1(%arg0: i32) -> (i32, i32) {
    %c0_i32 = arith.constant 0 : i32
    %c0_i32_0 = arith.constant 0 : i32
    %c0_i32_1 = arith.constant 0 : i32
    return %c0_i32, %c0_i32_0 : i32, i32
  }
  func.func @transform_2(%arg0: i32) -> (i32, i32, i32, i32) {
    %c0_i32 = arith.constant 0 : i32
    %c0_i32_0 = arith.constant 0 : i32
    %c0_i32_1 = arith.constant 0 : i32
    %c0_i32_2 = arith.constant 0 : i32
    return %arg0, %c0_i32, %c0_i32_0, %c0_i32_1 : i32, i32, i32, i32
  }
  func.func @transform_3(%arg0: i32) -> (i32, i32, i32, i32) {
    %c0_i32 = arith.constant 0 : i32
    %c0_i32_0 = arith.constant 0 : i32
    %c0_i32_1 = arith.constant 0 : i32
    %c0_i32_2 = arith.constant 0 : i32
    return %arg0, %c0_i32, %c0_i32_0, %c0_i32_1 : i32, i32, i32, i32
  }
  func.func @transform_4(%arg0: i32) -> (i32, i32, i32, i32) {
    %c0_i32 = arith.constant 0 : i32
    %c0_i32_0 = arith.constant 0 : i32
    %c0_i32_1 = arith.constant 0 : i32
    %c0_i32_2 = arith.constant 0 : i32
    return %arg0, %c0_i32, %c0_i32_0, %c0_i32_1 : i32, i32, i32, i32
  }
  func.func @transform_5(%arg0: i32) -> (i32, i32, i32, i32) {
    %c0_i32 = arith.constant 0 : i32
    %c0_i32_0 = arith.constant 0 : i32
    %c0_i32_1 = arith.constant 0 : i32
    %c0_i32_2 = arith.constant 0 : i32
    return %arg0, %c0_i32, %c0_i32_0, %c0_i32_1 : i32, i32, i32, i32
  }
  func.func @transform_6(%arg0: i32) -> (i32, i32, i32) {
    %c0_i32 = arith.constant 0 : i32
    %c0_i32_0 = arith.constant 0 : i32
    %c0_i32_1 = arith.constant 0 : i32
    return %arg0, %c0_i32, %c0_i32_0 : i32, i32, i32
  }
  func.func @transform_7(%arg0: i32) -> (i32, i32, i32) {
    %c0_i32 = arith.constant 0 : i32
    %c0_i32_0 = arith.constant 0 : i32
    %c0_i32_1 = arith.constant 0 : i32
    return %arg0, %c0_i32, %c0_i32_0 : i32, i32, i32
  }
  func.func @transform_8(%arg0: i32) -> (i32, i32, i32) {
    %c0_i32 = arith.constant 0 : i32
    %c0_i32_0 = arith.constant 0 : i32
    %c0_i32_1 = arith.constant 0 : i32
    return %arg0, %c0_i32, %c0_i32_0 : i32, i32, i32
  }
  func.func @transform_9(%arg0: i32) -> (i32, i32, i32) {
    %c0_i32 = arith.constant 0 : i32
    %c0_i32_0 = arith.constant 0 : i32
    %c0_i32_1 = arith.constant 0 : i32
    return %arg0, %c0_i32, %c0_i32_0 : i32, i32, i32
  }
  func.func @transform_10(%arg0: i32) -> (i32, i32) {
    %c0_i32 = arith.constant 0 : i32
    %c0_i32_0 = arith.constant 0 : i32
    %c0_i32_1 = arith.constant 0 : i32
    return %c0_i32, %c0_i32_0 : i32, i32
  }
  func.func @transform_11(%arg0: i32) -> (i32, i32) {
    %c0_i32 = arith.constant 0 : i32
    %c0_i32_0 = arith.constant 0 : i32
    %c0_i32_1 = arith.constant 0 : i32
    return %c0_i32, %c0_i32_0 : i32, i32
  }
}

</mosaic_0001>

<llo_original>
// kernel: frozen_clip_embedder_forward.1
$region0: #{frozen_clip_embedder_forward.1}
  #allocation0 [shape = 'u32[]', space=smem, size = 0x4, offset = 0x4, fixed_abs, tag = 'smem constant byte address 0x4 - core index']
  #allocation1 [shape = 'u32[144,128]{1,0:T(1,128)}', space=vmem, size = 0x12000, scoped, tag = 'internal scratch']
  #allocation2 [shape = 'f32[16,32]{1,0:T(8,128)}', space=vmem, size = 0x2000, scoped, tag = 'scratch operand']
  %s0 = inlined_call_operand.vmem [shape: f32[16,32], index: 0, kind: input, shape index: {}]
  %s1 = inlined_call_operand.vmem [shape: f32[8,8], index: 1, kind: input, shape index: {}]
  %s2 = inlined_call_operand.vmem [shape: f32[2,2,32,16], index: 2, kind: input, shape index: {}]
  %s3 = inlined_call_operand.vmem [shape: f32[2,2,32,16], index: 3, kind: input, shape index: {}]
  %s4 = inlined_call_operand.vmem [shape: f32[2,2,32,16], index: 4, kind: input, shape index: {}]
  %s5 = inlined_call_operand.vmem [shape: f32[2,2,16,32], index: 5, kind: input, shape index: {}]
  %s6 = inlined_call_operand.vmem [shape: f32[2,32,128], index: 6, kind: input, shape index: {}]
  %s7 = inlined_call_operand.vmem [shape: f32[2,128,32], index: 7, kind: input, shape index: {}]
  %s8 = inlined_call_operand.vmem [shape: f32[2,9,32], index: 8, kind: input, shape index: {}]
  %s9 = inlined_call_operand.vmem [shape: f32[2,1,128], index: 9, kind: input, shape index: {}]
  %s10 = inlined_call_operand.vmem [shape: f32[2,32], index: 10, kind: input, shape index: {}]
  %s11 = inlined_call_operand.hbm [shape: f32[16,32], index: 11, kind: output, shape index: {}]
  %s12 = sld [smem:[#allocation0]]
  $region85: #{frozen_clip_embedder_forward.1} parent=0
    _
  %s14 = ssub.s32 1, %s12
  %s15 = scalar_select 0, %s14, %s12
  $region1: #{frozen_clip_embedder_forward.1} parent=0
    #allocation3 [shape = 'u8[8192]{0}', space=vmem, size = 0x2000, scoped, tag = 'output window, operand 0, single buffered']
    #allocation4 [shape = 's32[2]{0}', space=sflag, size = 0x8, scoped, tag = 'scoped memory for frozen_clip_embedder_forward.1']
    %16 = vsyncpa [#allocation4], 0
    loop: start=0, step=1, limit=4
    $region2: #{frozen_clip_embedder_forward.1} parent=1 // loop_pre_header
      _
    $region3: #{frozen_clip_embedder_forward.1} parent=1 // loop_header
      %s18 = sphi 0, %s22
      %p19 = scmp.ge.s32.totalorder %s18, 4
      %s26 = sphi 0, %s26
      %s28 = sphi 0, %s26
      %s29 = sphi 0, %s28
      %s43 = sphi 0, %s29
      %s47 = sphi 0, %s47
      %s49 = sphi 0, %s47
      %s50 = sphi 0, %s49
      %s64 = sphi 0, %s50
      %s70 = sphi 0, %s72
      %s73 = sphi 0, %s70
      %s74 = sphi 0, %s73
      %s90 = sphi 0, %s74
      %s96 = sphi 0, %s98
      %s99 = sphi 0, %s96
      %s100 = sphi 0, %s99
      %s116 = sphi 0, %s100
      %s122 = sphi 0, %s124
      %s125 = sphi 0, %s122
      %s126 = sphi 0, %s125
      %s142 = sphi 0, %s126
      %s148 = sphi 0, %s150
      %s151 = sphi 0, %s148
      %s152 = sphi 0, %s151
      %s168 = sphi 0, %s152
      %s174 = sphi 0, %s176
      %s177 = sphi 0, %s174
      %s178 = sphi 0, %s177
      %s194 = sphi 0, %s178
      %s200 = sphi 0, %s202
      %s203 = sphi 0, %s200
      %s204 = sphi 0, %s203
      %s220 = sphi 0, %s204
      %s226 = sphi 0, %s228
      %s229 = sphi 0, %s226
      %s230 = sphi 0, %s229
      %s246 = sphi 0, %s230
      %s252 = sphi 0, %s254
      %s255 = sphi 0, %s252
      %s256 = sphi 0, %s255
      %s272 = sphi 0, %s256
      %s276 = sphi 0, %s276
      %s278 = sphi 0, %s276
      %s279 = sphi 0, %s278
      %s293 = sphi 0, %s279
      %s297 = sphi 0, %s297
      %s299 = sphi 0, %s297
      %s300 = sphi 0, %s299
      %s314 = sphi 0, %s300
    $region4: #{frozen_clip_embedder_forward.1} parent=1 // loop_header_branch
      %21 = sbr.rel (%p19) target = $region8
    $region5: #{frozen_clip_embedder_forward.1} parent=1 // loop_body
      %s23 = ssub.s32 %s18, 1
      %s24 = ssub.s32 %s18, 2
      %s25 = sadd.s32 %s18, 1
      %s27 = sadd.s32 %s26, 1
      %p30 = scmp.eq.s32.totalorder %s18, 1
      %p31 = scmp.ne.s32.totalorder %s26, %s28
      %p32 = scmp.eq.s32.totalorder %s18, 0
      %p33 = por %p31, %p32
      %p34 = scmp.ne.s32.totalorder %s26, %s28
      %p35 = scmp.eq.s32.totalorder %s23, 1
      %p36 = por %p34, %p35
      %p37 = scmp.ne.s32.totalorder %s28, %s29
      %p38 = scmp.eq.s32.totalorder %s23, 0
      %p39 = por %p37, %p38
      %p40 = scmp.ne.s32.totalorder %s28, %s29
      %p41 = scmp.eq.s32.totalorder %s24, 1
      %p42 = por %p40, %p41
      %p44 = scmp.ne.s32.totalorder %s29, %s43
      %p45 = scmp.eq.s32.totalorder %s24, 0
      %p46 = por %p44, %p45
      %s48 = sadd.s32 %s47, 1
      %p51 = scmp.eq.s32.totalorder %s18, 1
      %p52 = scmp.ne.s32.totalorder %s47, %s49
      %p53 = scmp.eq.s32.totalorder %s18, 0
      %p54 = por %p52, %p53
      %p55 = scmp.ne.s32.totalorder %s47, %s49
      %p56 = scmp.eq.s32.totalorder %s23, 1
      %p57 = por %p55, %p56
      %p58 = scmp.ne.s32.totalorder %s49, %s50
      %p59 = scmp.eq.s32.totalorder %s23, 0
      %p60 = por %p58, %p59
      %p61 = scmp.ne.s32.totalorder %s49, %s50
      %p62 = scmp.eq.s32.totalorder %s24, 1
      %p63 = por %p61, %p62
      %p65 = scmp.ne.s32.totalorder %s50, %s64
      %p66 = scmp.eq.s32.totalorder %s24, 0
      %p67 = por %p65, %p66
      %s68 = ssub.s32 %s18, %s25
      %p69 = scmp.eq.s32.totalorder %s68, 0
      %s71 = sadd.s32 %s70, 1
      %s72 = scalar_select %p69, %s70, %s71
      %p75 = pneg %p69
      %p76 = scmp.eq.s32.totalorder %s18, 1
      %p77 = por %p75, %p76
      %p78 = scmp.ne.s32.totalorder %s70, %s73
      %p79 = scmp.eq.s32.totalorder %s18, 0
      %p80 = por %p78, %p79
      %p81 = scmp.ne.s32.totalorder %s70, %s73
      %p82 = scmp.eq.s32.totalorder %s23, 1
      %p83 = por %p81, %p82
      %p84 = scmp.ne.s32.totalorder %s73, %s74
      %p85 = scmp.eq.s32.totalorder %s23, 0
      %p86 = por %p84, %p85
      %p87 = scmp.ne.s32.totalorder %s73, %s74
      %p88 = scmp.eq.s32.totalorder %s24, 1
      %p89 = por %p87, %p88
      %p91 = scmp.ne.s32.totalorder %s74, %s90
      %p92 = scmp.eq.s32.totalorder %s24, 0
      %p93 = por %p91, %p92
      %s94 = ssub.s32 %s18, %s25
      %p95 = scmp.eq.s32.totalorder %s94, 0
      %s97 = sadd.s32 %s96, 1
      %s98 = scalar_select %p95, %s96, %s97
      %p101 = pneg %p95
      %p102 = scmp.eq.s32.totalorder %s18, 1
      %p103 = por %p101, %p102
      %p104 = scmp.ne.s32.totalorder %s96, %s99
      %p105 = scmp.eq.s32.totalorder %s18, 0
      %p106 = por %p104, %p105
      %p107 = scmp.ne.s32.totalorder %s96, %s99
      %p108 = scmp.eq.s32.totalorder %s23, 1
      %p109 = por %p107, %p108
      %p110 = scmp.ne.s32.totalorder %s99, %s100
      %p111 = scmp.eq.s32.totalorder %s23, 0
      %p112 = por %p110, %p111
      %p113 = scmp.ne.s32.totalorder %s99, %s100
      %p114 = scmp.eq.s32.totalorder %s24, 1
      %p115 = por %p113, %p114
      %p117 = scmp.ne.s32.totalorder %s100, %s116
      %p118 = scmp.eq.s32.totalorder %s24, 0
      %p119 = por %p117, %p118
      %s120 = ssub.s32 %s18, %s25
      %p121 = scmp.eq.s32.totalorder %s120, 0
      %s123 = sadd.s32 %s122, 1
      %s124 = scalar_select %p121, %s122, %s123
      %p127 = pneg %p121
      %p128 = scmp.eq.s32.totalorder %s18, 1
      %p129 = por %p127, %p128
      %p130 = scmp.ne.s32.totalorder %s122, %s125
      %p131 = scmp.eq.s32.totalorder %s18, 0
      %p132 = por %p130, %p131
      %p133 = scmp.ne.s32.totalorder %s122, %s125
      %p134 = scmp.eq.s32.totalorder %s23, 1
      %p135 = por %p133, %p134
      %p136 = scmp.ne.s32.totalorder %s125, %s126
      %p137 = scmp.eq.s32.totalorder %s23, 0
      %p138 = por %p136, %p137
      %p139 = scmp.ne.s32.totalorder %s125, %s126
      %p140 = scmp.eq.s32.totalorder %s24, 1
      %p141 = por %p139, %p140
      %p143 = scmp.ne.s32.totalorder %s126, %s142
      %p144 = scmp.eq.s32.totalorder %s24, 0
      %p145 = por %p143, %p144
      %s146 = ssub.s32 %s18, %s25
      %p147 = scmp.eq.s32.totalorder %s146, 0
      %s149 = sadd.s32 %s148, 1
      %s150 = scalar_select %p147, %s148, %s149
      %p153 = pneg %p147
      %p154 = scmp.eq.s32.totalorder %s18, 1
      %p155 = por %p153, %p154
      %p156 = scmp.ne.s32.totalorder %s148, %s151
      %p157 = scmp.eq.s32.totalorder %s18, 0
      %p158 = por %p156, %p157
      %p159 = scmp.ne.s32.totalorder %s148, %s151
      %p160 = scmp.eq.s32.totalorder %s23, 1
      %p161 = por %p159, %p160
      %p162 = scmp.ne.s32.totalorder %s151, %s152
      %p163 = scmp.eq.s32.totalorder %s23, 0
      %p164 = por %p162, %p163
      %p165 = scmp.ne.s32.totalorder %s151, %s152
      %p166 = scmp.eq.s32.totalorder %s24, 1
      %p167 = por %p165, %p166
      %p169 = scmp.ne.s32.totalorder %s152, %s168
      %p170 = scmp.eq.s32.totalorder %s24, 0
      %p171 = por %p169, %p170
      %s172 = ssub.s32 %s18, %s25
      %p173 = scmp.eq.s32.totalorder %s172, 0
      %s175 = sadd.s32 %s174, 1
      %s176 = scalar_select %p173, %s174, %s175
      %p179 = pneg %p173
      %p180 = scmp.eq.s32.totalorder %s18, 1
      %p181 = por %p179, %p180
      %p182 = scmp.ne.s32.totalorder %s174, %s177
      %p183 = scmp.eq.s32.totalorder %s18, 0
      %p184 = por %p182, %p183
      %p185 = scmp.ne.s32.totalorder %s174, %s177
      %p186 = scmp.eq.s32.totalorder %s23, 1
      %p187 = por %p185, %p186
      %p188 = scmp.ne.s32.totalorder %s177, %s178
      %p189 = scmp.eq.s32.totalorder %s23, 0
      %p190 = por %p188, %p189
      %p191 = scmp.ne.s32.totalorder %s177, %s178
      %p192 = scmp.eq.s32.totalorder %s24, 1
      %p193 = por %p191, %p192
      %p195 = scmp.ne.s32.totalorder %s178, %s194
      %p196 = scmp.eq.s32.totalorder %s24, 0
      %p197 = por %p195, %p196
      %s198 = ssub.s32 %s18, %s25
      %p199 = scmp.eq.s32.totalorder %s198, 0
      %s201 = sadd.s32 %s200, 1
      %s202 = scalar_select %p199, %s200, %s201
      %p205 = pneg %p199
      %p206 = scmp.eq.s32.totalorder %s18, 1
      %p207 = por %p205, %p206
      %p208 = scmp.ne.s32.totalorder %s200, %s203
      %p209 = scmp.eq.s32.totalorder %s18, 0
      %p210 = por %p208, %p209
      %p211 = scmp.ne.s32.totalorder %s200, %s203
      %p212 = scmp.eq.s32.totalorder %s23, 1
      %p213 = por %p211, %p212
      %p214 = scmp.ne.s32.totalorder %s203, %s204
      %p215 = scmp.eq.s32.totalorder %s23, 0
      %p216 = por %p214, %p215
      %p217 = scmp.ne.s32.totalorder %s203, %s204
      %p218 = scmp.eq.s32.totalorder %s24, 1
      %p219 = por %p217, %p218
      %p221 = scmp.ne.s32.totalorder %s204, %s220
      %p222 = scmp.eq.s32.totalorder %s24, 0
      %p223 = por %p221, %p222
      %s224 = ssub.s32 %s18, %s25
      %p225 = scmp.eq.s32.totalorder %s224, 0
      %s227 = sadd.s32 %s226, 1
      %s228 = scalar_select %p225, %s226, %s227
      %p231 = pneg %p225
      %p232 = scmp.eq.s32.totalorder %s18, 1
      %p233 = por %p231, %p232
      %p234 = scmp.ne.s32.totalorder %s226, %s229
      %p235 = scmp.eq.s32.totalorder %s18, 0
      %p236 = por %p234, %p235
      %p237 = scmp.ne.s32.totalorder %s226, %s229
      %p238 = scmp.eq.s32.totalorder %s23, 1
      %p239 = por %p237, %p238
      %p240 = scmp.ne.s32.totalorder %s229, %s230
      %p241 = scmp.eq.s32.totalorder %s23, 0
      %p242 = por %p240, %p241
      %p243 = scmp.ne.s32.totalorder %s229, %s230
      %p244 = scmp.eq.s32.totalorder %s24, 1
      %p245 = por %p243, %p244
      %p247 = scmp.ne.s32.totalorder %s230, %s246
      %p248 = scmp.eq.s32.totalorder %s24, 0
      %p249 = por %p247, %p248
      %s250 = ssub.s32 %s18, %s25
      %p251 = scmp.eq.s32.totalorder %s250, 0
      %s253 = sadd.s32 %s252, 1
      %s254 = scalar_select %p251, %s252, %s253
      %p257 = pneg %p251
      %p258 = scmp.eq.s32.totalorder %s18, 1
      %p259 = por %p257, %p258
      %p260 = scmp.ne.s32.totalorder %s252, %s255
      %p261 = scmp.eq.s32.totalorder %s18, 0
      %p262 = por %p260, %p261
      %p263 = scmp.ne.s32.totalorder %s252, %s255
      %p264 = scmp.eq.s32.totalorder %s23, 1
      %p265 = por %p263, %p264
      %p266 = scmp.ne.s32.totalorder %s255, %s256
      %p267 = scmp.eq.s32.totalorder %s23, 0
      %p268 = por %p266, %p267
      %p269 = scmp.ne.s32.totalorder %s255, %s256
      %p270 = scmp.eq.s32.totalorder %s24, 1
      %p271 = por %p269, %p270
      %p273 = scmp.ne.s32.totalorder %s256, %s272
      %p274 = scmp.eq.s32.totalorder %s24, 0
      %p275 = por %p273, %p274
      %s277 = sadd.s32 %s276, 1
      %p280 = scmp.eq.s32.totalorder %s18, 1
      %p281 = scmp.ne.s32.totalorder %s276, %s278
      %p282 = scmp.eq.s32.totalorder %s18, 0
      %p283 = por %p281, %p282
      %p284 = scmp.ne.s32.totalorder %s276, %s278
      %p285 = scmp.eq.s32.totalorder %s23, 1
      %p286 = por %p284, %p285
      %p287 = scmp.ne.s32.totalorder %s278, %s279
      %p288 = scmp.eq.s32.totalorder %s23, 0
      %p289 = por %p287, %p288
      %p290 = scmp.ne.s32.totalorder %s278, %s279
      %p291 = scmp.eq.s32.totalorder %s24, 1
      %p292 = por %p290, %p291
      %p294 = scmp.ne.s32.totalorder %s279, %s293
      %p295 = scmp.eq.s32.totalorder %s24, 0
      %p296 = por %p294, %p295
      %s298 = sadd.s32 %s297, 1
      %p301 = scmp.eq.s32.totalorder %s18, 1
      %p302 = scmp.ne.s32.totalorder %s297, %s299
      %p303 = scmp.eq.s32.totalorder %s18, 0
      %p304 = por %p302, %p303
      %p305 = scmp.ne.s32.totalorder %s297, %s299
      %p306 = scmp.eq.s32.totalorder %s23, 1
      %p307 = por %p305, %p306
      %p308 = scmp.ne.s32.totalorder %s299, %s300
      %p309 = scmp.eq.s32.totalorder %s23, 0
      %p310 = por %p308, %p309
      %p311 = scmp.ne.s32.totalorder %s299, %s300
      %p312 = scmp.eq.s32.totalorder %s24, 1
      %p313 = por %p311, %p312
      %p315 = scmp.ne.s32.totalorder %s300, %s314
      %p316 = scmp.eq.s32.totalorder %s24, 0
      %p317 = por %p315, %p316
      %p318 = scmp.le.s32.totalorder 1, %s18
      %p319 = scmp.lt.s32.totalorder %s18, 3
      %p320 = pnand %p318, %p319
      %p321 = pneg %p320
      // Predicated region
      $region9: #{frozen_clip_embedder_forward.1} parent=5 // pred_check
        _
      $region10: #{frozen_clip_embedder_forward.1} parent=5 // pred_check_branch
        %323 = sbr.rel (%p320) target = $region12
      $region11: #{frozen_clip_embedder_forward.1} parent=5 // pred_region
        %s324 = ssub.s32 %s18, 1
        // Predicated region
        $region13: #{frozen_clip_embedder_forward.1} parent=11 // pred_check
          %p325 = pneg %p39
        $region14: #{frozen_clip_embedder_forward.1} parent=11 // pred_check_branch
          %327 = sbr.rel (%p325) target = $region16
        $region15: #{frozen_clip_embedder_forward.1} parent=11 // pred_region
          _
        $region16: #{frozen_clip_embedder_forward.1} parent=11 // pred_fallthru
          _
        // Predicated region
        $region17: #{frozen_clip_embedder_forward.1} parent=11 // pred_check
          %p328 = pneg %p60
        $region18: #{frozen_clip_embedder_forward.1} parent=11 // pred_check_branch
          %330 = sbr.rel (%p328) target = $region20
        $region19: #{frozen_clip_embedder_forward.1} parent=11 // pred_region
          _
        $region20: #{frozen_clip_embedder_forward.1} parent=11 // pred_fallthru
          _
        // Predicated region
        $region21: #{frozen_clip_embedder_forward.1} parent=11 // pred_check
          %p331 = pneg %p289
        $region22: #{frozen_clip_embedder_forward.1} parent=11 // pred_check_branch
          %333 = sbr.rel (%p331) target = $region24
        $region23: #{frozen_clip_embedder_forward.1} parent=11 // pred_region
          _
        $region24: #{frozen_clip_embedder_forward.1} parent=11 // pred_fallthru
          _
      $region12: #{frozen_clip_embedder_forward.1} parent=5 // pred_fallthru
        _
      %p334 = scmp.lt.s32.totalorder %s18, 2
      // Predicated region
      $region25: #{frozen_clip_embedder_forward.1} parent=5 // pred_check
        %p335 = pneg %p334
      $region26: #{frozen_clip_embedder_forward.1} parent=5 // pred_check_branch
        %337 = sbr.rel (%p335) target = $region28
      $region27: #{frozen_clip_embedder_forward.1} parent=5 // pred_region
        // Predicated region
        $region29: #{frozen_clip_embedder_forward.1} parent=27 // pred_check
          %p338 = pneg %p80
        $region30: #{frozen_clip_embedder_forward.1} parent=27 // pred_check_branch
          %340 = sbr.rel (%p338) target = $region32
        $region31: #{frozen_clip_embedder_forward.1} parent=27 // pred_region
          %p341 = scmp.lt.s32.totalorder %s18, 1
          %s342 = scalar_select %p341, %s18, 1
          %s343 = smul.addr %s342, 8
          %s344 = smul.addr %s343, 8
          %s345 = scalar_lea.vmem %s2, %s344
        $region32: #{frozen_clip_embedder_forward.1} parent=27 // pred_fallthru
          _
        // Predicated region
        $region33: #{frozen_clip_embedder_forward.1} parent=27 // pred_check
          %p346 = pneg %p106
        $region34: #{frozen_clip_embedder_forward.1} parent=27 // pred_check_branch
          %348 = sbr.rel (%p346) target = $region36
        $region35: #{frozen_clip_embedder_forward.1} parent=27 // pred_region
          %p349 = scmp.lt.s32.totalorder %s18, 1
          %s350 = scalar_select %p349, %s18, 1
          %s351 = smul.addr %s350, 8
          %s352 = smul.addr %s351, 8
          %s353 = scalar_lea.vmem %s3, %s352
        $region36: #{frozen_clip_embedder_forward.1} parent=27 // pred_fallthru
          _
        // Predicated region
        $region37: #{frozen_clip_embedder_forward.1} parent=27 // pred_check
          %p354 = pneg %p132
        $region38: #{frozen_clip_embedder_forward.1} parent=27 // pred_check_branch
          %356 = sbr.rel (%p354) target = $region40
        $region39: #{frozen_clip_embedder_forward.1} parent=27 // pred_region
          %p357 = scmp.lt.s32.totalorder %s18, 1
          %s358 = scalar_select %p357, %s18, 1
          %s359 = smul.addr %s358, 8
          %s360 = smul.addr %s359, 8
          %s361 = scalar_lea.vmem %s4, %s360
        $region40: #{frozen_clip_embedder_forward.1} parent=27 // pred_fallthru
          _
        // Predicated region
        $region41: #{frozen_clip_embedder_forward.1} parent=27 // pred_check
          %p362 = pneg %p158
        $region42: #{frozen_clip_embedder_forward.1} parent=27 // pred_check_branch
          %364 = sbr.rel (%p362) target = $region44
        $region43: #{frozen_clip_embedder_forward.1} parent=27 // pred_region
          %p365 = scmp.lt.s32.totalorder %s18, 1
          %s366 = scalar_select %p365, %s18, 1
          %s367 = smul.addr %s366, 4
          %s368 = smul.addr %s367, 8
          %s369 = scalar_lea.vmem %s5, %s368
        $region44: #{frozen_clip_embedder_forward.1} parent=27 // pred_fallthru
          _
        // Predicated region
        $region45: #{frozen_clip_embedder_forward.1} parent=27 // pred_check
          %p370 = pneg %p184
        $region46: #{frozen_clip_embedder_forward.1} parent=27 // pred_check_branch
          %372 = sbr.rel (%p370) target = $region48
        $region47: #{frozen_clip_embedder_forward.1} parent=27 // pred_region
          %p373 = scmp.lt.s32.totalorder %s18, 1
          %s374 = scalar_select %p373, %s18, 1
          %s375 = smul.addr %s374, 4
          %s376 = smul.addr %s375, 8
          %s377 = scalar_lea.vmem %s6, %s376
        $region48: #{frozen_clip_embedder_forward.1} parent=27 // pred_fallthru
          _
        // Predicated region
        $region49: #{frozen_clip_embedder_forward.1} parent=27 // pred_check
          %p378 = pneg %p210
        $region50: #{frozen_clip_embedder_forward.1} parent=27 // pred_check_branch
          %380 = sbr.rel (%p378) target = $region52
        $region51: #{frozen_clip_embedder_forward.1} parent=27 // pred_region
          %p381 = scmp.lt.s32.totalorder %s18, 1
          %s382 = scalar_select %p381, %s18, 1
          %s383 = smul.addr %s382, 16
          %s384 = smul.addr %s383, 8
          %s385 = scalar_lea.vmem %s7, %s384
        $region52: #{frozen_clip_embedder_forward.1} parent=27 // pred_fallthru
          _
        // Predicated region
        $region53: #{frozen_clip_embedder_forward.1} parent=27 // pred_check
          %p386 = pneg %p236
        $region54: #{frozen_clip_embedder_forward.1} parent=27 // pred_check_branch
          %388 = sbr.rel (%p386) target = $region56
        $region55: #{frozen_clip_embedder_forward.1} parent=27 // pred_region
          %p389 = scmp.lt.s32.totalorder %s18, 1
          %s390 = scalar_select %p389, %s18, 1
          %s391 = smul.addr %s390, 2
          %s392 = smul.addr %s391, 8
          %s393 = scalar_lea.vmem %s8, %s392
        $region56: #{frozen_clip_embedder_forward.1} parent=27 // pred_fallthru
          _
        // Predicated region
        $region57: #{frozen_clip_embedder_forward.1} parent=27 // pred_check
          %p394 = pneg %p262
        $region58: #{frozen_clip_embedder_forward.1} parent=27 // pred_check_branch
          %396 = sbr.rel (%p394) target = $region60
        $region59: #{frozen_clip_embedder_forward.1} parent=27 // pred_region
          %p397 = scmp.lt.s32.totalorder %s18, 1
          %s398 = scalar_select %p397, %s18, 1
          %s399 = scalar_lea.vmem %s9, %s398
        $region60: #{frozen_clip_embedder_forward.1} parent=27 // pred_fallthru
          _
      $region28: #{frozen_clip_embedder_forward.1} parent=5 // pred_fallthru
        _
      %p400 = scmp.le.s32.totalorder 1, %s18
      %p401 = scmp.lt.s32.totalorder %s18, 3
      %p402 = pnand %p400, %p401
      %p403 = pneg %p402
      // Predicated region
      $region61: #{frozen_clip_embedder_forward.1} parent=5 // pred_check
        _
      $region62: #{frozen_clip_embedder_forward.1} parent=5 // pred_check_branch
        %405 = sbr.rel (%p402) target = $region64
      $region63: #{frozen_clip_embedder_forward.1} parent=5 // pred_region
        %s406 = ssub.s32 %s18, 1
        %p407 = pneg %p39
        %p408 = pneg %p36
        %p409 = pneg %p60
        %p410 = pneg %p57
        %p411 = scmp.lt.s32.totalorder %s23, 1
        %s412 = scalar_select %p411, %s23, 1
        %s413 = smul.addr %s412, 8
        %s414 = smul.addr %s413, 8
        %s415 = scalar_lea.vmem %s2, %s414
        %p416 = pneg %p86
        %p417 = pneg %p83
        %p418 = scmp.lt.s32.totalorder %s23, 1
        %s419 = scalar_select %p418, %s23, 1
        %s420 = smul.addr %s419, 8
        %s421 = smul.addr %s420, 8
        %s422 = scalar_lea.vmem %s3, %s421
        %p423 = pneg %p112
        %p424 = pneg %p109
        %p425 = scmp.lt.s32.totalorder %s23, 1
        %s426 = scalar_select %p425, %s23, 1
        %s427 = smul.addr %s426, 8
        %s428 = smul.addr %s427, 8
        %s429 = scalar_lea.vmem %s4, %s428
        %p430 = pneg %p138
        %p431 = pneg %p135
        %p432 = scmp.lt.s32.totalorder %s23, 1
        %s433 = scalar_select %p432, %s23, 1
        %s434 = smul.addr %s433, 4
        %s435 = smul.addr %s434, 8
        %s436 = scalar_lea.vmem %s5, %s435
        %p437 = pneg %p164
        %p438 = pneg %p161
        %p439 = scmp.lt.s32.totalorder %s23, 1
        %s440 = scalar_select %p439, %s23, 1
        %s441 = smul.addr %s440, 4
        %s442 = smul.addr %s441, 8
        %s443 = scalar_lea.vmem %s6, %s442
        %p444 = pneg %p190
        %p445 = pneg %p187
        %p446 = scmp.lt.s32.totalorder %s23, 1
        %s447 = scalar_select %p446, %s23, 1
        %s448 = smul.addr %s447, 16
        %s449 = smul.addr %s448, 8
        %s450 = scalar_lea.vmem %s7, %s449
        %p451 = pneg %p216
        %p452 = pneg %p213
        %p453 = scmp.lt.s32.totalorder %s23, 1
        %s454 = scalar_select %p453, %s23, 1
        %s455 = smul.addr %s454, 2
        %s456 = smul.addr %s455, 8
        %s457 = scalar_lea.vmem %s8, %s456
        %p458 = pneg %p242
        %p459 = pneg %p239
        %p460 = scmp.lt.s32.totalorder %s23, 1
        %s461 = scalar_select %p460, %s23, 1
        %s462 = scalar_lea.vmem %s9, %s461
        %p463 = pneg %p268
        %p464 = pneg %p265
        %p465 = pneg %p289
        %p466 = pneg %p286
        %p467 = pneg %p310
        %p468 = pneg %p307
        %p469 = scmp.lt.s32.totalorder %s23, 1
        %s470 = scalar_select %p469, %s23, 1
        %s471 = smul.addr %s470, 8
        %s472 = smul.addr %s471, 8
        %s473 = scalar_lea.vmem %s2, %s472
        %p474 = scmp.lt.s32.totalorder %s23, 1
        %s475 = scalar_select %p474, %s23, 1
        %s476 = smul.addr %s475, 8
        %s477 = smul.addr %s476, 8
        %s478 = scalar_lea.vmem %s3, %s477
        %p479 = scmp.lt.s32.totalorder %s23, 1
        %s480 = scalar_select %p479, %s23, 1
        %s481 = smul.addr %s480, 8
        %s482 = smul.addr %s481, 8
        %s483 = scalar_lea.vmem %s4, %s482
        %p484 = scmp.lt.s32.totalorder %s23, 1
        %s485 = scalar_select %p484, %s23, 1
        %s486 = smul.addr %s485, 4
        %s487 = smul.addr %s486, 8
        %s488 = scalar_lea.vmem %s5, %s487
        %p489 = scmp.lt.s32.totalorder %s23, 1
        %s490 = scalar_select %p489, %s23, 1
        %s491 = smul.addr %s490, 4
        %s492 = smul.addr %s491, 8
        %s493 = scalar_lea.vmem %s6, %s492
        %p494 = scmp.lt.s32.totalorder %s23, 1
        %s495 = scalar_select %p494, %s23, 1
        %s496 = smul.addr %s495, 16
        %s497 = smul.addr %s496, 8
        %s498 = scalar_lea.vmem %s7, %s497
        %p499 = scmp.lt.s32.totalorder %s23, 1
        %s500 = scalar_select %p499, %s23, 1
        %s501 = smul.addr %s500, 2
        %s502 = smul.addr %s501, 8
        %s503 = scalar_lea.vmem %s8, %s502
        %p504 = scmp.lt.s32.totalorder %s23, 1
        %s505 = scalar_select %p504, %s23, 1
        %s506 = scalar_lea.vmem %s9, %s505
        %p507 = scmp.eq.s32.totalorder %s23, 0
        // Predicated region
        $region65: #{frozen_clip_embedder_forward.1} parent=63 // pred_check
          %p508 = pneg %p507
        $region66: #{frozen_clip_embedder_forward.1} parent=63 // pred_check_branch
          %510 = sbr.rel (%p508) target = $region68
        $region67: #{frozen_clip_embedder_forward.1} parent=63 // pred_region
          %v511 = vld [vmem:[%s0] sm:$0xff]
          %v512 = vld [vmem:[%s0 + $0x8] sm:$0xff]
          %vm513 = vcmask 261120
          %514 = vst.msk [vmem:[#allocation2] sm:$0xff] %vm513, %v511
          %515 = vst.msk [vmem:[#allocation2 + $0x8] sm:$0xff] %vm513, %v512
        $region68: #{frozen_clip_embedder_forward.1} parent=63 // pred_fallthru
          _
        %v516 = vld [vmem:[#allocation2] sm:$0xff]
        %v517 = vld [vmem:[#allocation2 + $0x8] sm:$0xff]
        %v518 = vld [vmem:[%s503] sm:$0xff]
        %v519 = vld [vmem:[%s503 + $0x8] sm:$0x1]
        %v520 = vld [vmem:[%s506] sm:$0x1]
        %v521 = vld [vmem:[%s1] sm:$0xff]
        %vm522 = vcmask 261120
        %v523 = vsel %vm522, %v516, 0.0
        %524 = vadd.xlane.f32.xlu0 %v523
        %v525 = vpop.xlane.xlu0 %524
        %v526 = vsel %vm522, %v517, 0.0
        %527 = vadd.xlane.f32.xlu0 %v526
        %v528 = vpop.xlane.xlu0 %527
        %v529 = vrcp.pop 32.0
        %v530 = vmul.f32 %v525, %v529
        %v531 = vmul.f32 %v528, %v529
        %v532 = vsub.f32 %v516, %v530
        %v533 = vsub.f32 %v517, %v531
        %v534 = vmul.f32 %v532, %v532
        %v535 = vmul.f32 %v533, %v533
        %v536 = vsel %vm522, %v534, 0.0
        %537 = vadd.xlane.f32.xlu0 %v536
        %v538 = vpop.xlane.xlu0 %537
        %v539 = vsel %vm522, %v535, 0.0
        %540 = vadd.xlane.f32.xlu0 %v539
        %v541 = vpop.xlane.xlu0 %540
        %v542 = vmul.f32 %v538, %v529
        %v543 = vmul.f32 %v541, %v529
        %v544 = vadd.f32 %v542, 1e-05
        %v545 = vadd.f32 %v543, 1e-05
        %v546 = vrsqrt.pop %v544
        %v547 = vrsqrt.pop %v545
        %v548 = vmul.f32 %v532, %v546
        %v549 = vmul.f32 %v533, %v547
        %v550 = vlaneseq
        %v551 = vshrl.u32 %v550, 7
        %v552 = vsub.s32 0, %v551
        %v553 = vrot.slane %v518, %v552
        %v554 = vmul.f32 %v548, %v553
        %v555 = vmul.f32 %v549, %v553
        %v556 = vlaneseq
        %v557 = vshrl.u32 %v556, 7
        %v558 = vsub.s32 1, %v557
        %v559 = vrot.slane %v518, %v558
        %v560 = vadd.f32 %v554, %v559
        %v561 = vadd.f32 %v555, %v559
        %v562 = vld [vmem:[%s473] sm:$0xff]
        %v563 = vld [vmem:[%s473 + $0x8] sm:$0xff]
        %v564 = vld [vmem:[%s473 + $0x10] sm:$0xff]
        %v565 = vld [vmem:[%s473 + $0x18] sm:$0xff]
        %v566 = vlaneseq
        %v567 = vshrl.u32 %v566, 7
        %v568 = vsub.s32 4, %v567
        %v569 = vrot.slane %v518, %v568
        %v571 = vsel %vm522, %v560, 0
        %v574 = vsel %vm522, %v561, 0
        %576 = vmatprep.subr.mxu0 0.0
        %577 = vmatpush1.msra.mxu0 0.0
        %578 = vmatprep.subr.mxu0 0.0
        %579 = vmatpush1.msra.mxu0 0.0
        %580 = vmatprep.subr.mxu0 0.0
        %581 = vmatpush1.msra.mxu0 0.0
        %582 = vmatprep.subr.mxu0 0.0
        %583 = vmatpush1.msra.mxu0 0.0
        %584 = vmatprep.subr.mxu0 0.0
        %585 = vmatpush1.msra.mxu0 0.0
        %586 = vmatprep.subr.mxu0 0.0
        %587 = vmatpush1.msra.mxu0 0.0
        %588 = vmatprep.subr.mxu0 0.0
        %589 = vmatpush1.msra.mxu0 0.0
        %590 = vmatprep.subr.mxu0 0.0
        %591 = vmatpush1.msra.mxu0 0.0
        %592 = vmatprep.subr.mxu0 0.0
        %593 = vmatpush1.msra.mxu0 0.0
        %594 = vmatprep.subr.mxu0 0.0
        %595 = vmatpush1.msra.mxu0 0.0
        %596 = vmatprep.subr.mxu0 0.0
        %597 = vmatpush1.msra.mxu0 0.0
        %598 = vmatprep.subr.mxu0 0.0
        %599 = vmatpush1.msra.mxu0 0.0
        %600 = vmatprep.subr.mxu0 0.0
        %601 = vmatpush1.msra.mxu0 %v565
        %602 = vmatprep.subr.mxu0 0.0
        %603 = vmatpush1.msra.mxu0 %v564
        %604 = vmatprep.subr.mxu0 0.0
        %605 = vmatpush1.msra.mxu0 %v563
        %606 = vmatprep.subr.mxu0 0.0
        %607 = vmatpush1.msra.mxu0 %v562
        %608 = vmatprep.subr.mxu0 0.0
        %609 = vmatpush2.msra.mxu0 0.0
        %610 = vmatprep.subr.mxu0 0.0
        %611 = vmatpush2.msra.mxu0 0.0
        %612 = vmatprep.subr.mxu0 0.0
        %613 = vmatpush2.msra.mxu0 0.0
        %614 = vmatprep.subr.mxu0 0.0
        %615 = vmatpush2.msra.mxu0 0.0
        %616 = vmatprep.subr.mxu0 0.0
        %617 = vmatpush2.msra.mxu0 0.0
        %618 = vmatprep.subr.mxu0 0.0
        %619 = vmatpush2.msra.mxu0 0.0
        %620 = vmatprep.subr.mxu0 0.0
        %621 = vmatpush2.msra.mxu0 0.0
        %622 = vmatprep.subr.mxu0 0.0
        %623 = vmatpush2.msra.mxu0 0.0
        %624 = vmatprep.subr.mxu0 0.0
        %625 = vmatpush2.msra.mxu0 0.0
        %626 = vmatprep.subr.mxu0 0.0
        %627 = vmatpush2.msra.mxu0 0.0
        %628 = vmatprep.subr.mxu0 0.0
        %629 = vmatpush2.msra.mxu0 0.0
        %630 = vmatprep.subr.mxu0 0.0
        %631 = vmatpush2.msra.mxu0 0.0
        %632 = vmatprep.subr.mxu0 0.0
        %633 = vmatpush2.msra.mxu0 0.0
        %634 = vmatprep.subr.mxu0 0.0
        %635 = vmatpush2.msra.mxu0 0.0
        %636 = vmatprep.subr.mxu0 0.0
        %637 = vmatpush2.msra.mxu0 0.0
        %638 = vmatprep.subr.mxu0 0.0
        %639 = vmatpush2.msra.mxu0 0.0
        %640 = vmatprep.mubr.f32.mxu0 0.0
        %641 = vmatmul.mubr.f32.gmra.mxu0 %v571
        %v642 = vpop.f32.mrf.mxu0
        %v643 = vadd.f32 %v569, %v642
        %v644 = vpop.f32.mrf.mxu0
        %645 = vmatprep.mubr.f32.mxu0 0.0
        %646 = vmatmul.mubr.f32.gmra.mxu0 %v574
        %v647 = vpop.f32.mrf.mxu0
        %v648 = vadd.f32 %v569, %v647
        %v649 = vpop.f32.mrf.mxu0
        %650 = vdwg.mxu0
        %v651 = vmul.f32 %v643, 0.25
        %v652 = vmul.f32 %v648, 0.25
        %v653 = vld [vmem:[%s478] sm:$0xff]
        %v654 = vld [vmem:[%s478 + $0x8] sm:$0xff]
        %v655 = vld [vmem:[%s478 + $0x10] sm:$0xff]
        %v656 = vld [vmem:[%s478 + $0x18] sm:$0xff]
        %v657 = vlaneseq
        %v658 = vshrl.u32 %v657, 7
        %v659 = vsub.s32 5, %v658
        %v660 = vrot.slane %v518, %v659
        %661 = vmatprep.subr.mxu0 0.0
        %662 = vmatpush1.msra.mxu0 0.0
        %663 = vmatprep.subr.mxu0 0.0
        %664 = vmatpush1.msra.mxu0 0.0
        %665 = vmatprep.subr.mxu0 0.0
        %666 = vmatpush1.msra.mxu0 0.0
        %667 = vmatprep.subr.mxu0 0.0
        %668 = vmatpush1.msra.mxu0 0.0
        %669 = vmatprep.subr.mxu0 0.0
        %670 = vmatpush1.msra.mxu0 0.0
        %671 = vmatprep.subr.mxu0 0.0
        %672 = vmatpush1.msra.mxu0 0.0
        %673 = vmatprep.subr.mxu0 0.0
        %674 = vmatpush1.msra.mxu0 0.0
        %675 = vmatprep.subr.mxu0 0.0
        %676 = vmatpush1.msra.mxu0 0.0
        %677 = vmatprep.subr.mxu0 0.0
        %678 = vmatpush1.msra.mxu0 0.0
        %679 = vmatprep.subr.mxu0 0.0
        %680 = vmatpush1.msra.mxu0 0.0
        %681 = vmatprep.subr.mxu0 0.0
        %682 = vmatpush1.msra.mxu0 0.0
        %683 = vmatprep.subr.mxu0 0.0
        %684 = vmatpush1.msra.mxu0 0.0
        %685 = vmatprep.subr.mxu0 0.0
        %686 = vmatpush1.msra.mxu0 %v656
        %687 = vmatprep.subr.mxu0 0.0
        %688 = vmatpush1.msra.mxu0 %v655
        %689 = vmatprep.subr.mxu0 0.0
        %690 = vmatpush1.msra.mxu0 %v654
        %691 = vmatprep.subr.mxu0 0.0
        %692 = vmatpush1.msra.mxu0 %v653
        %693 = vmatprep.subr.mxu0 0.0
        %694 = vmatpush2.msra.mxu0 0.0
        %695 = vmatprep.subr.mxu0 0.0
        %696 = vmatpush2.msra.mxu0 0.0
        %697 = vmatprep.subr.mxu0 0.0
        %698 = vmatpush2.msra.mxu0 0.0
        %699 = vmatprep.subr.mxu0 0.0
        %700 = vmatpush2.msra.mxu0 0.0
        %701 = vmatprep.subr.mxu0 0.0
        %702 = vmatpush2.msra.mxu0 0.0
        %703 = vmatprep.subr.mxu0 0.0
        %704 = vmatpush2.msra.mxu0 0.0
        %705 = vmatprep.subr.mxu0 0.0
        %706 = vmatpush2.msra.mxu0 0.0
        %707 = vmatprep.subr.mxu0 0.0
        %708 = vmatpush2.msra.mxu0 0.0
        %709 = vmatprep.subr.mxu0 0.0
        %710 = vmatpush2.msra.mxu0 0.0
        %711 = vmatprep.subr.mxu0 0.0
        %712 = vmatpush2.msra.mxu0 0.0
        %713 = vmatprep.subr.mxu0 0.0
        %714 = vmatpush2.msra.mxu0 0.0
        %715 = vmatprep.subr.mxu0 0.0
        %716 = vmatpush2.msra.mxu0 0.0
        %717 = vmatprep.subr.mxu0 0.0
        %718 = vmatpush2.msra.mxu0 0.0
        %719 = vmatprep.subr.mxu0 0.0
        %720 = vmatpush2.msra.mxu0 0.0
        %721 = vmatprep.subr.mxu0 0.0
        %722 = vmatpush2.msra.mxu0 0.0
        %723 = vmatprep.subr.mxu0 0.0
        %724 = vmatpush2.msra.mxu0 0.0
        %725 = vmatprep.mubr.f32.mxu0 0.0
        %726 = vmatmul.mubr.f32.gmra.mxu0 %v571
        %v727 = vpop.f32.mrf.mxu0
        %v728 = vadd.f32 %v660, %v727
        %v729 = vpop.f32.mrf.mxu0
        %730 = vmatprep.mubr.f32.mxu0 0.0
        %731 = vmatmul.mubr.f32.gmra.mxu0 %v574
        %v732 = vpop.f32.mrf.mxu0
        %v733 = vadd.f32 %v660, %v732
        %v734 = vpop.f32.mrf.mxu0
        %735 = vdwg.mxu0
        %v736 = vld [vmem:[%s483] sm:$0xff]
        %v737 = vld [vmem:[%s483 + $0x8] sm:$0xff]
        %v738 = vld [vmem:[%s483 + $0x10] sm:$0xff]
        %v739 = vld [vmem:[%s483 + $0x18] sm:$0xff]
        %v740 = vlaneseq
        %v741 = vshrl.u32 %v740, 7
        %v742 = vsub.s32 6, %v741
        %v743 = vrot.slane %v518, %v742
        %744 = vmatprep.subr.mxu0 0.0
        %745 = vmatpush1.msra.mxu0 0.0
        %746 = vmatprep.subr.mxu0 0.0
        %747 = vmatpush1.msra.mxu0 0.0
        %748 = vmatprep.subr.mxu0 0.0
        %749 = vmatpush1.msra.mxu0 0.0
        %750 = vmatprep.subr.mxu0 0.0
        %751 = vmatpush1.msra.mxu0 0.0
        %752 = vmatprep.subr.mxu0 0.0
        %753 = vmatpush1.msra.mxu0 0.0
        %754 = vmatprep.subr.mxu0 0.0
        %755 = vmatpush1.msra.mxu0 0.0
        %756 = vmatprep.subr.mxu0 0.0
        %757 = vmatpush1.msra.mxu0 0.0
        %758 = vmatprep.subr.mxu0 0.0
        %759 = vmatpush1.msra.mxu0 0.0
        %760 = vmatprep.subr.mxu0 0.0
        %761 = vmatpush1.msra.mxu0 0.0
        %762 = vmatprep.subr.mxu0 0.0
        %763 = vmatpush1.msra.mxu0 0.0
        %764 = vmatprep.subr.mxu0 0.0
        %765 = vmatpush1.msra.mxu0 0.0
        %766 = vmatprep.subr.mxu0 0.0
        %767 = vmatpush1.msra.mxu0 0.0
        %768 = vmatprep.subr.mxu0 0.0
        %769 = vmatpush1.msra.mxu0 %v739
        %770 = vmatprep.subr.mxu0 0.0
        %771 = vmatpush1.msra.mxu0 %v738
        %772 = vmatprep.subr.mxu0 0.0
        %773 = vmatpush1.msra.mxu0 %v737
        %774 = vmatprep.subr.mxu0 0.0
        %775 = vmatpush1.msra.mxu0 %v736
        %776 = vmatprep.subr.mxu0 0.0
        %777 = vmatpush2.msra.mxu0 0.0
        %778 = vmatprep.subr.mxu0 0.0
        %779 = vmatpush2.msra.mxu0 0.0
        %780 = vmatprep.subr.mxu0 0.0
        %781 = vmatpush2.msra.mxu0 0.0
        %782 = vmatprep.subr.mxu0 0.0
        %783 = vmatpush2.msra.mxu0 0.0
        %784 = vmatprep.subr.mxu0 0.0
        %785 = vmatpush2.msra.mxu0 0.0
        %786 = vmatprep.subr.mxu0 0.0
        %787 = vmatpush2.msra.mxu0 0.0
        %788 = vmatprep.subr.mxu0 0.0
        %789 = vmatpush2.msra.mxu0 0.0
        %790 = vmatprep.subr.mxu0 0.0
        %791 = vmatpush2.msra.mxu0 0.0
        %792 = vmatprep.subr.mxu0 0.0
        %793 = vmatpush2.msra.mxu0 0.0
        %794 = vmatprep.subr.mxu0 0.0
        %795 = vmatpush2.msra.mxu0 0.0
        %796 = vmatprep.subr.mxu0 0.0
        %797 = vmatpush2.msra.mxu0 0.0
        %798 = vmatprep.subr.mxu0 0.0
        %799 = vmatpush2.msra.mxu0 0.0
        %800 = vmatprep.subr.mxu0 0.0
        %801 = vmatpush2.msra.mxu0 0.0
        %802 = vmatprep.subr.mxu0 0.0
        %803 = vmatpush2.msra.mxu0 0.0
        %804 = vmatprep.subr.mxu0 0.0
        %805 = vmatpush2.msra.mxu0 0.0
        %806 = vmatprep.subr.mxu0 0.0
        %807 = vmatpush2.msra.mxu0 0.0
        %808 = vmatprep.mubr.f32.mxu0 0.0
        %809 = vmatmul.mubr.f32.gmra.mxu0 %v571
        %v810 = vpop.f32.mrf.mxu0
        %v811 = vadd.f32 %v743, %v810
        %v812 = vpop.f32.mrf.mxu0
        %813 = vmatprep.mubr.f32.mxu0 0.0
        %814 = vmatmul.mubr.f32.gmra.mxu0 %v574
        %v815 = vpop.f32.mrf.mxu0
        %v816 = vadd.f32 %v743, %v815
        %v817 = vpop.f32.mrf.mxu0
        %818 = vdwg.mxu0
        %vm819 = vcmask 130048
        %v821 = vsel %vm819, %v651, 0
        %v824 = vsel %vm819, %v728, 0
        %826 = vmatprep.subr.mxu0 0.0
        %827 = vmatpush1.xpose.msra.mxu0 0.0
        %828 = vmatprep.subr.mxu0 0.0
        %829 = vmatpush1.xpose.msra.mxu0 0.0
        %830 = vmatprep.subr.mxu0 0.0
        %831 = vmatpush1.xpose.msra.mxu0 0.0
        %832 = vmatprep.subr.mxu0 0.0
        %833 = vmatpush1.xpose.msra.mxu0 0.0
        %834 = vmatprep.subr.mxu0 0.0
        %835 = vmatpush1.xpose.msra.mxu0 0.0
        %836 = vmatprep.subr.mxu0 0.0
        %837 = vmatpush1.xpose.msra.mxu0 0.0
        %838 = vmatprep.subr.mxu0 0.0
        %839 = vmatpush1.xpose.msra.mxu0 0.0
        %840 = vmatprep.subr.mxu0 0.0
        %841 = vmatpush1.xpose.msra.mxu0 0.0
        %842 = vmatprep.subr.mxu0 0.0
        %843 = vmatpush1.xpose.msra.mxu0 0.0
        %844 = vmatprep.subr.mxu0 0.0
        %845 = vmatpush1.xpose.msra.mxu0 0.0
        %846 = vmatprep.subr.mxu0 0.0
        %847 = vmatpush1.xpose.msra.mxu0 0.0
        %848 = vmatprep.subr.mxu0 0.0
        %849 = vmatpush1.xpose.msra.mxu0 0.0
        %850 = vmatprep.subr.mxu0 0.0
        %851 = vmatpush1.xpose.msra.mxu0 0.0
        %852 = vmatprep.subr.mxu0 0.0
        %853 = vmatpush1.xpose.msra.mxu0 0.0
        %854 = vmatprep.subr.mxu0 0.0
        %855 = vmatpush1.xpose.msra.mxu0 0.0
        %856 = vmatprep.subr.mxu0 0.0
        %857 = vmatpush1.xpose.msra.mxu0 %v824
        %858 = vmatprep.subr.mxu0 0.0
        %859 = vmatpush2.xpose.msra.mxu0 0.0
        %860 = vmatprep.subr.mxu0 0.0
        %861 = vmatpush2.xpose.msra.mxu0 0.0
        %862 = vmatprep.subr.mxu0 0.0
        %863 = vmatpush2.xpose.msra.mxu0 0.0
        %864 = vmatprep.subr.mxu0 0.0
        %865 = vmatpush2.xpose.msra.mxu0 0.0
        %866 = vmatprep.subr.mxu0 0.0
        %867 = vmatpush2.xpose.msra.mxu0 0.0
        %868 = vmatprep.subr.mxu0 0.0
        %869 = vmatpush2.xpose.msra.mxu0 0.0
        %870 = vmatprep.subr.mxu0 0.0
        %871 = vmatpush2.xpose.msra.mxu0 0.0
        %872 = vmatprep.subr.mxu0 0.0
        %873 = vmatpush2.xpose.msra.mxu0 0.0
        %874 = vmatprep.subr.mxu0 0.0
        %875 = vmatpush2.xpose.msra.mxu0 0.0
        %876 = vmatprep.subr.mxu0 0.0
        %877 = vmatpush2.xpose.msra.mxu0 0.0
        %878 = vmatprep.subr.mxu0 0.0
        %879 = vmatpush2.xpose.msra.mxu0 0.0
        %880 = vmatprep.subr.mxu0 0.0
        %881 = vmatpush2.xpose.msra.mxu0 0.0
        %882 = vmatprep.subr.mxu0 0.0
        %883 = vmatpush2.xpose.msra.mxu0 0.0
        %884 = vmatprep.subr.mxu0 0.0
        %885 = vmatpush2.xpose.msra.mxu0 0.0
        %886 = vmatprep.subr.mxu0 0.0
        %887 = vmatpush2.xpose.msra.mxu0 0.0
        %888 = vmatprep.subr.mxu0 0.0
        %889 = vmatpush2.xpose.msra.mxu0 0.0
        %890 = vmatprep.mubr.f32.mxu0 0.0
        %891 = vmatmul.mubr.f32.gmra.mxu0 %v821
        %v892 = vpop.f32.mrf.mxu0
        %v893 = vadd.f32 %v521, %v892
        %v894 = vpop.f32.mrf.mxu0
        %895 = vdwg.mxu0
        %v897 = vsel %vm819, %v652, 0
        %v900 = vsel %vm819, %v733, 0
        %902 = vmatprep.subr.mxu0 0.0
        %903 = vmatpush1.xpose.msra.mxu0 0.0
        %904 = vmatprep.subr.mxu0 0.0
        %905 = vmatpush1.xpose.msra.mxu0 0.0
        %906 = vmatprep.subr.mxu0 0.0
        %907 = vmatpush1.xpose.msra.mxu0 0.0
        %908 = vmatprep.subr.mxu0 0.0
        %909 = vmatpush1.xpose.msra.mxu0 0.0
        %910 = vmatprep.subr.mxu0 0.0
        %911 = vmatpush1.xpose.msra.mxu0 0.0
        %912 = vmatprep.subr.mxu0 0.0
        %913 = vmatpush1.xpose.msra.mxu0 0.0
        %914 = vmatprep.subr.mxu0 0.0
        %915 = vmatpush1.xpose.msra.mxu0 0.0
        %916 = vmatprep.subr.mxu0 0.0
        %917 = vmatpush1.xpose.msra.mxu0 0.0
        %918 = vmatprep.subr.mxu0 0.0
        %919 = vmatpush1.xpose.msra.mxu0 0.0
        %920 = vmatprep.subr.mxu0 0.0
        %921 = vmatpush1.xpose.msra.mxu0 0.0
        %922 = vmatprep.subr.mxu0 0.0
        %923 = vmatpush1.xpose.msra.mxu0 0.0
        %924 = vmatprep.subr.mxu0 0.0
        %925 = vmatpush1.xpose.msra.mxu0 0.0
        %926 = vmatprep.subr.mxu0 0.0
        %927 = vmatpush1.xpose.msra.mxu0 0.0
        %928 = vmatprep.subr.mxu0 0.0
        %929 = vmatpush1.xpose.msra.mxu0 0.0
        %930 = vmatprep.subr.mxu0 0.0
        %931 = vmatpush1.xpose.msra.mxu0 0.0
        %932 = vmatprep.subr.mxu0 0.0
        %933 = vmatpush1.xpose.msra.mxu0 %v900
        %934 = vmatprep.subr.mxu0 0.0
        %935 = vmatpush2.xpose.msra.mxu0 0.0
        %936 = vmatprep.subr.mxu0 0.0
        %937 = vmatpush2.xpose.msra.mxu0 0.0
        %938 = vmatprep.subr.mxu0 0.0
        %939 = vmatpush2.xpose.msra.mxu0 0.0
        %940 = vmatprep.subr.mxu0 0.0
        %941 = vmatpush2.xpose.msra.mxu0 0.0
        %942 = vmatprep.subr.mxu0 0.0
        %943 = vmatpush2.xpose.msra.mxu0 0.0
        %944 = vmatprep.subr.mxu0 0.0
        %945 = vmatpush2.xpose.msra.mxu0 0.0
        %946 = vmatprep.subr.mxu0 0.0
        %947 = vmatpush2.xpose.msra.mxu0 0.0
        %948 = vmatprep.subr.mxu0 0.0
        %949 = vmatpush2.xpose.msra.mxu0 0.0
        %950 = vmatprep.subr.mxu0 0.0
        %951 = vmatpush2.xpose.msra.mxu0 0.0
        %952 = vmatprep.subr.mxu0 0.0
        %953 = vmatpush2.xpose.msra.mxu0 0.0
        %954 = vmatprep.subr.mxu0 0.0
        %955 = vmatpush2.xpose.msra.mxu0 0.0
        %956 = vmatprep.subr.mxu0 0.0
        %957 = vmatpush2.xpose.msra.mxu0 0.0
        %958 = vmatprep.subr.mxu0 0.0
        %959 = vmatpush2.xpose.msra.mxu0 0.0
        %960 = vmatprep.subr.mxu0 0.0
        %961 = vmatpush2.xpose.msra.mxu0 0.0
        %962 = vmatprep.subr.mxu0 0.0
        %963 = vmatpush2.xpose.msra.mxu0 0.0
        %964 = vmatprep.subr.mxu0 0.0
        %965 = vmatpush2.xpose.msra.mxu0 0.0
        %966 = vmatprep.mubr.f32.mxu0 0.0
        %967 = vmatmul.mubr.f32.gmra.mxu0 %v897
        %v968 = vpop.f32.mrf.mxu0
        %v969 = vadd.f32 %v521, %v968
        %v970 = vpop.f32.mrf.mxu0
        %971 = vdwg.mxu0
        %vm972 = vcmask 64512
        %v973 = vsel %vm972, %v893, -inf
        %974 = vmax.xlane.f32.xlu0 %v973
        %v975 = vpop.xlane.xlu0 %974
        %v976 = vsel %vm972, %v969, -inf
        %977 = vmax.xlane.f32.xlu0 %v976
        %v978 = vpop.xlane.xlu0 %977
        %v979 = vsub.f32 %v893, %v975
        %v980 = vsub.f32 %v969, %v978
        %v981 = vmul.f32 %v979, 1.442695
        %v982 = vpow.pop %v981
        %v983 = vmul.f32 %v980, 1.442695
        %v984 = vpow.pop %v983
        %v985 = vsel %vm972, %v982, 0.0
        %986 = vadd.xlane.f32.xlu0 %v985
        %v987 = vpop.xlane.xlu0 %986
        %v988 = vsel %vm972, %v984, 0.0
        %989 = vadd.xlane.f32.xlu0 %v988
        %v990 = vpop.xlane.xlu0 %989
        %v991 = vrcp.pop %v987
        %v992 = vrcp.pop %v990
        %v993 = vmul.f32 %v982, %v991
        %v994 = vmul.f32 %v984, %v992
        %v996 = vsel %vm972, %v993, 0
        %998 = vmatprep.subr.mxu0 0.0
        %999 = vmatpush1.msra.mxu0 0.0
        %1000 = vmatprep.subr.mxu0 0.0
        %1001 = vmatpush1.msra.mxu0 0.0
        %1002 = vmatprep.subr.mxu0 0.0
        %1003 = vmatpush1.msra.mxu0 0.0
        %1004 = vmatprep.subr.mxu0 0.0
        %1005 = vmatpush1.msra.mxu0 0.0
        %1006 = vmatprep.subr.mxu0 0.0
        %1007 = vmatpush1.msra.mxu0 0.0
        %1008 = vmatprep.subr.mxu0 0.0
        %1009 = vmatpush1.msra.mxu0 0.0
        %1010 = vmatprep.subr.mxu0 0.0
        %1011 = vmatpush1.msra.mxu0 0.0
        %1012 = vmatprep.subr.mxu0 0.0
        %1013 = vmatpush1.msra.mxu0 0.0
        %1014 = vmatprep.subr.mxu0 0.0
        %1015 = vmatpush1.msra.mxu0 0.0
        %1016 = vmatprep.subr.mxu0 0.0
        %1017 = vmatpush1.msra.mxu0 0.0
        %1018 = vmatprep.subr.mxu0 0.0
        %1019 = vmatpush1.msra.mxu0 0.0
        %1020 = vmatprep.subr.mxu0 0.0
        %1021 = vmatpush1.msra.mxu0 0.0
        %1022 = vmatprep.subr.mxu0 0.0
        %1023 = vmatpush1.msra.mxu0 0.0
        %1024 = vmatprep.subr.mxu0 0.0
        %1025 = vmatpush1.msra.mxu0 0.0
        %1026 = vmatprep.subr.mxu0 0.0
        %1027 = vmatpush1.msra.mxu0 0.0
        %1028 = vmatprep.subr.mxu0 0.0
        %1029 = vmatpush1.msra.mxu0 %v811
        %1030 = vmatprep.subr.mxu0 0.0
        %1031 = vmatpush2.msra.mxu0 0.0
        %1032 = vmatprep.subr.mxu0 0.0
        %1033 = vmatpush2.msra.mxu0 0.0
        %1034 = vmatprep.subr.mxu0 0.0
        %1035 = vmatpush2.msra.mxu0 0.0
        %1036 = vmatprep.subr.mxu0 0.0
        %1037 = vmatpush2.msra.mxu0 0.0
        %1038 = vmatprep.subr.mxu0 0.0
        %1039 = vmatpush2.msra.mxu0 0.0
        %1040 = vmatprep.subr.mxu0 0.0
        %1041 = vmatpush2.msra.mxu0 0.0
        %1042 = vmatprep.subr.mxu0 0.0
        %1043 = vmatpush2.msra.mxu0 0.0
        %1044 = vmatprep.subr.mxu0 0.0
        %1045 = vmatpush2.msra.mxu0 0.0
        %1046 = vmatprep.subr.mxu0 0.0
        %1047 = vmatpush2.msra.mxu0 0.0
        %1048 = vmatprep.subr.mxu0 0.0
        %1049 = vmatpush2.msra.mxu0 0.0
        %1050 = vmatprep.subr.mxu0 0.0
        %1051 = vmatpush2.msra.mxu0 0.0
        %1052 = vmatprep.subr.mxu0 0.0
        %1053 = vmatpush2.msra.mxu0 0.0
        %1054 = vmatprep.subr.mxu0 0.0
        %1055 = vmatpush2.msra.mxu0 0.0
        %1056 = vmatprep.subr.mxu0 0.0
        %1057 = vmatpush2.msra.mxu0 0.0
        %1058 = vmatprep.subr.mxu0 0.0
        %1059 = vmatpush2.msra.mxu0 0.0
        %1060 = vmatprep.subr.mxu0 0.0
        %1061 = vmatpush2.msra.mxu0 0.0
        %1062 = vmatprep.mubr.f32.mxu0 0.0
        %1063 = vmatmul.mubr.f32.gmra.mxu0 %v996
        %v1064 = vpop.f32.mrf.mxu0
        %v1065 = vadd.f32 0.0, %v1064
        %v1066 = vpop.f32.mrf.mxu0
        %1067 = vdwg.mxu0
        %v1069 = vsel %vm972, %v994, 0
        %1071 = vmatprep.subr.mxu0 0.0
        %1072 = vmatpush1.msra.mxu0 0.0
        %1073 = vmatprep.subr.mxu0 0.0
        %1074 = vmatpush1.msra.mxu0 0.0
        %1075 = vmatprep.subr.mxu0 0.0
        %1076 = vmatpush1.msra.mxu0 0.0
        %1077 = vmatprep.subr.mxu0 0.0
        %1078 = vmatpush1.msra.mxu0 0.0
        %1079 = vmatprep.subr.mxu0 0.0
        %1080 = vmatpush1.msra.mxu0 0.0
        %1081 = vmatprep.subr.mxu0 0.0
        %1082 = vmatpush1.msra.mxu0 0.0
        %1083 = vmatprep.subr.mxu0 0.0
        %1084 = vmatpush1.msra.mxu0 0.0
        %1085 = vmatprep.subr.mxu0 0.0
        %1086 = vmatpush1.msra.mxu0 0.0
        %1087 = vmatprep.subr.mxu0 0.0
        %1088 = vmatpush1.msra.mxu0 0.0
        %1089 = vmatprep.subr.mxu0 0.0
        %1090 = vmatpush1.msra.mxu0 0.0
        %1091 = vmatprep.subr.mxu0 0.0
        %1092 = vmatpush1.msra.mxu0 0.0
        %1093 = vmatprep.subr.mxu0 0.0
        %1094 = vmatpush1.msra.mxu0 0.0
        %1095 = vmatprep.subr.mxu0 0.0
        %1096 = vmatpush1.msra.mxu0 0.0
        %1097 = vmatprep.subr.mxu0 0.0
        %1098 = vmatpush1.msra.mxu0 0.0
        %1099 = vmatprep.subr.mxu0 0.0
        %1100 = vmatpush1.msra.mxu0 0.0
        %1101 = vmatprep.subr.mxu0 0.0
        %1102 = vmatpush1.msra.mxu0 %v816
        %1103 = vmatprep.subr.mxu0 0.0
        %1104 = vmatpush2.msra.mxu0 0.0
        %1105 = vmatprep.subr.mxu0 0.0
        %1106 = vmatpush2.msra.mxu0 0.0
        %1107 = vmatprep.subr.mxu0 0.0
        %1108 = vmatpush2.msra.mxu0 0.0
        %1109 = vmatprep.subr.mxu0 0.0
        %1110 = vmatpush2.msra.mxu0 0.0
        %1111 = vmatprep.subr.mxu0 0.0
        %1112 = vmatpush2.msra.mxu0 0.0
        %1113 = vmatprep.subr.mxu0 0.0
        %1114 = vmatpush2.msra.mxu0 0.0
        %1115 = vmatprep.subr.mxu0 0.0
        %1116 = vmatpush2.msra.mxu0 0.0
        %1117 = vmatprep.subr.mxu0 0.0
        %1118 = vmatpush2.msra.mxu0 0.0
        %1119 = vmatprep.subr.mxu0 0.0
        %1120 = vmatpush2.msra.mxu0 0.0
        %1121 = vmatprep.subr.mxu0 0.0
        %1122 = vmatpush2.msra.mxu0 0.0
        %1123 = vmatprep.subr.mxu0 0.0
        %1124 = vmatpush2.msra.mxu0 0.0
        %1125 = vmatprep.subr.mxu0 0.0
        %1126 = vmatpush2.msra.mxu0 0.0
        %1127 = vmatprep.subr.mxu0 0.0
        %1128 = vmatpush2.msra.mxu0 0.0
        %1129 = vmatprep.subr.mxu0 0.0
        %1130 = vmatpush2.msra.mxu0 0.0
        %1131 = vmatprep.subr.mxu0 0.0
        %1132 = vmatpush2.msra.mxu0 0.0
        %1133 = vmatprep.subr.mxu0 0.0
        %1134 = vmatpush2.msra.mxu0 0.0
        %1135 = vmatprep.mubr.f32.mxu0 0.0
        %1136 = vmatmul.mubr.f32.gmra.mxu0 %v1069
        %v1137 = vpop.f32.mrf.mxu0
        %v1138 = vadd.f32 0.0, %v1137
        %v1139 = vpop.f32.mrf.mxu0
        %1140 = vdwg.mxu0
        %v1141 = vld [vmem:[%s488] sm:$0xff]
        %v1142 = vld [vmem:[%s488 + $0x8] sm:$0xff]
        %s1143 = scalar_lea.vmem %s473, 32
        %v1144 = vld [vmem:[%s1143] sm:$0xff]
        %v1145 = vld [vmem:[%s1143 + $0x8] sm:$0xff]
        %v1146 = vld [vmem:[%s1143 + $0x10] sm:$0xff]
        %v1147 = vld [vmem:[%s1143 + $0x18] sm:$0xff]
        %1149 = vrot.lane.b32.xlu0 %v569, 112
        %v1150 = vpop.permute.xlu0 %1149
        %1152 = vmatprep.subr.mxu0 0.0
        %1153 = vmatpush1.msra.mxu0 0.0
        %1154 = vmatprep.subr.mxu0 0.0
        %1155 = vmatpush1.msra.mxu0 0.0
        %1156 = vmatprep.subr.mxu0 0.0
        %1157 = vmatpush1.msra.mxu0 0.0
        %1158 = vmatprep.subr.mxu0 0.0
        %1159 = vmatpush1.msra.mxu0 0.0
        %1160 = vmatprep.subr.mxu0 0.0
        %1161 = vmatpush1.msra.mxu0 0.0
        %1162 = vmatprep.subr.mxu0 0.0
        %1163 = vmatpush1.msra.mxu0 0.0
        %1164 = vmatprep.subr.mxu0 0.0
        %1165 = vmatpush1.msra.mxu0 0.0
        %1166 = vmatprep.subr.mxu0 0.0
        %1167 = vmatpush1.msra.mxu0 0.0
        %1168 = vmatprep.subr.mxu0 0.0
        %1169 = vmatpush1.msra.mxu0 0.0
        %1170 = vmatprep.subr.mxu0 0.0
        %1171 = vmatpush1.msra.mxu0 0.0
        %1172 = vmatprep.subr.mxu0 0.0
        %1173 = vmatpush1.msra.mxu0 0.0
        %1174 = vmatprep.subr.mxu0 0.0
        %1175 = vmatpush1.msra.mxu0 0.0
        %1176 = vmatprep.subr.mxu0 0.0
        %1177 = vmatpush1.msra.mxu0 %v1147
        %1178 = vmatprep.subr.mxu0 0.0
        %1179 = vmatpush1.msra.mxu0 %v1146
        %1180 = vmatprep.subr.mxu0 0.0
        %1181 = vmatpush1.msra.mxu0 %v1145
        %1182 = vmatprep.subr.mxu0 0.0
        %1183 = vmatpush1.msra.mxu0 %v1144
        %1184 = vmatprep.subr.mxu0 0.0
        %1185 = vmatpush2.msra.mxu0 0.0
        %1186 = vmatprep.subr.mxu0 0.0
        %1187 = vmatpush2.msra.mxu0 0.0
        %1188 = vmatprep.subr.mxu0 0.0
        %1189 = vmatpush2.msra.mxu0 0.0
        %1190 = vmatprep.subr.mxu0 0.0
        %1191 = vmatpush2.msra.mxu0 0.0
        %1192 = vmatprep.subr.mxu0 0.0
        %1193 = vmatpush2.msra.mxu0 0.0
        %1194 = vmatprep.subr.mxu0 0.0
        %1195 = vmatpush2.msra.mxu0 0.0
        %1196 = vmatprep.subr.mxu0 0.0
        %1197 = vmatpush2.msra.mxu0 0.0
        %1198 = vmatprep.subr.mxu0 0.0
        %1199 = vmatpush2.msra.mxu0 0.0
        %1200 = vmatprep.subr.mxu0 0.0
        %1201 = vmatpush2.msra.mxu0 0.0
        %1202 = vmatprep.subr.mxu0 0.0
        %1203 = vmatpush2.msra.mxu0 0.0
        %1204 = vmatprep.subr.mxu0 0.0
        %1205 = vmatpush2.msra.mxu0 0.0
        %1206 = vmatprep.subr.mxu0 0.0
        %1207 = vmatpush2.msra.mxu0 0.0
        %1208 = vmatprep.subr.mxu0 0.0
        %1209 = vmatpush2.msra.mxu0 0.0
        %1210 = vmatprep.subr.mxu0 0.0
        %1211 = vmatpush2.msra.mxu0 0.0
        %1212 = vmatprep.subr.mxu0 0.0
        %1213 = vmatpush2.msra.mxu0 0.0
        %1214 = vmatprep.subr.mxu0 0.0
        %1215 = vmatpush2.msra.mxu0 0.0
        %1216 = vmatprep.mubr.f32.mxu0 0.0
        %1217 = vmatmul.mubr.f32.gmra.mxu0 %v571
        %v1218 = vpop.f32.mrf.mxu0
        %v1219 = vadd.f32 %v1150, %v1218
        %v1220 = vpop.f32.mrf.mxu0
        %1221 = vmatprep.mubr.f32.mxu0 0.0
        %1222 = vmatmul.mubr.f32.gmra.mxu0 %v574
        %v1223 = vpop.f32.mrf.mxu0
        %v1224 = vadd.f32 %v1150, %v1223
        %v1225 = vpop.f32.mrf.mxu0
        %1226 = vdwg.mxu0
        %v1227 = vmul.f32 %v1219, 0.25
        %v1228 = vmul.f32 %v1224, 0.25
        %s1229 = scalar_lea.vmem %s478, 32
        %v1230 = vld [vmem:[%s1229] sm:$0xff]
        %v1231 = vld [vmem:[%s1229 + $0x8] sm:$0xff]
        %v1232 = vld [vmem:[%s1229 + $0x10] sm:$0xff]
        %v1233 = vld [vmem:[%s1229 + $0x18] sm:$0xff]
        %1235 = vrot.lane.b32.xlu0 %v660, 112
        %v1236 = vpop.permute.xlu0 %1235
        %1238 = vmatprep.subr.mxu0 0.0
        %1239 = vmatpush1.msra.mxu0 0.0
        %1240 = vmatprep.subr.mxu0 0.0
        %1241 = vmatpush1.msra.mxu0 0.0
        %1242 = vmatprep.subr.mxu0 0.0
        %1243 = vmatpush1.msra.mxu0 0.0
        %1244 = vmatprep.subr.mxu0 0.0
        %1245 = vmatpush1.msra.mxu0 0.0
        %1246 = vmatprep.subr.mxu0 0.0
        %1247 = vmatpush1.msra.mxu0 0.0
        %1248 = vmatprep.subr.mxu0 0.0
        %1249 = vmatpush1.msra.mxu0 0.0
        %1250 = vmatprep.subr.mxu0 0.0
        %1251 = vmatpush1.msra.mxu0 0.0
        %1252 = vmatprep.subr.mxu0 0.0
        %1253 = vmatpush1.msra.mxu0 0.0
        %1254 = vmatprep.subr.mxu0 0.0
        %1255 = vmatpush1.msra.mxu0 0.0
        %1256 = vmatprep.subr.mxu0 0.0
        %1257 = vmatpush1.msra.mxu0 0.0
        %1258 = vmatprep.subr.mxu0 0.0
        %1259 = vmatpush1.msra.mxu0 0.0
        %1260 = vmatprep.subr.mxu0 0.0
        %1261 = vmatpush1.msra.mxu0 0.0
        %1262 = vmatprep.subr.mxu0 0.0
        %1263 = vmatpush1.msra.mxu0 %v1233
        %1264 = vmatprep.subr.mxu0 0.0
        %1265 = vmatpush1.msra.mxu0 %v1232
        %1266 = vmatprep.subr.mxu0 0.0
        %1267 = vmatpush1.msra.mxu0 %v1231
        %1268 = vmatprep.subr.mxu0 0.0
        %1269 = vmatpush1.msra.mxu0 %v1230
        %1270 = vmatprep.subr.mxu0 0.0
        %1271 = vmatpush2.msra.mxu0 0.0
        %1272 = vmatprep.subr.mxu0 0.0
        %1273 = vmatpush2.msra.mxu0 0.0
        %1274 = vmatprep.subr.mxu0 0.0
        %1275 = vmatpush2.msra.mxu0 0.0
        %1276 = vmatprep.subr.mxu0 0.0
        %1277 = vmatpush2.msra.mxu0 0.0
        %1278 = vmatprep.subr.mxu0 0.0
        %1279 = vmatpush2.msra.mxu0 0.0
        %1280 = vmatprep.subr.mxu0 0.0
        %1281 = vmatpush2.msra.mxu0 0.0
        %1282 = vmatprep.subr.mxu0 0.0
        %1283 = vmatpush2.msra.mxu0 0.0
        %1284 = vmatprep.subr.mxu0 0.0
        %1285 = vmatpush2.msra.mxu0 0.0
        %1286 = vmatprep.subr.mxu0 0.0
        %1287 = vmatpush2.msra.mxu0 0.0
        %1288 = vmatprep.subr.mxu0 0.0
        %1289 = vmatpush2.msra.mxu0 0.0
        %1290 = vmatprep.subr.mxu0 0.0
        %1291 = vmatpush2.msra.mxu0 0.0
        %1292 = vmatprep.subr.mxu0 0.0
        %1293 = vmatpush2.msra.mxu0 0.0
        %1294 = vmatprep.subr.mxu0 0.0
        %1295 = vmatpush2.msra.mxu0 0.0
        %1296 = vmatprep.subr.mxu0 0.0
        %1297 = vmatpush2.msra.mxu0 0.0
        %1298 = vmatprep.subr.mxu0 0.0
        %1299 = vmatpush2.msra.mxu0 0.0
        %1300 = vmatprep.subr.mxu0 0.0
        %1301 = vmatpush2.msra.mxu0 0.0
        %1302 = vmatprep.mubr.f32.mxu0 0.0
        %1303 = vmatmul.mubr.f32.gmra.mxu0 %v571
        %v1304 = vpop.f32.mrf.mxu0
        %v1305 = vadd.f32 %v1236, %v1304
        %v1306 = vpop.f32.mrf.mxu0
        %1307 = vmatprep.mubr.f32.mxu0 0.0
        %1308 = vmatmul.mubr.f32.gmra.mxu0 %v574
        %v1309 = vpop.f32.mrf.mxu0
        %v1310 = vadd.f32 %v1236, %v1309
        %v1311 = vpop.f32.mrf.mxu0
        %1312 = vdwg.mxu0
        %s1313 = scalar_lea.vmem %s483, 32
        %v1314 = vld [vmem:[%s1313] sm:$0xff]
        %v1315 = vld [vmem:[%s1313 + $0x8] sm:$0xff]
        %v1316 = vld [vmem:[%s1313 + $0x10] sm:$0xff]
        %v1317 = vld [vmem:[%s1313 + $0x18] sm:$0xff]
        %1319 = vrot.lane.b32.xlu0 %v743, 112
        %v1320 = vpop.permute.xlu0 %1319
        %1322 = vmatprep.subr.mxu0 0.0
        %1323 = vmatpush1.msra.mxu0 0.0
        %1324 = vmatprep.subr.mxu0 0.0
        %1325 = vmatpush1.msra.mxu0 0.0
        %1326 = vmatprep.subr.mxu0 0.0
        %1327 = vmatpush1.msra.mxu0 0.0
        %1328 = vmatprep.subr.mxu0 0.0
        %1329 = vmatpush1.msra.mxu0 0.0
        %1330 = vmatprep.subr.mxu0 0.0
        %1331 = vmatpush1.msra.mxu0 0.0
        %1332 = vmatprep.subr.mxu0 0.0
        %1333 = vmatpush1.msra.mxu0 0.0
        %1334 = vmatprep.subr.mxu0 0.0
        %1335 = vmatpush1.msra.mxu0 0.0
        %1336 = vmatprep.subr.mxu0 0.0
        %1337 = vmatpush1.msra.mxu0 0.0
        %1338 = vmatprep.subr.mxu0 0.0
        %1339 = vmatpush1.msra.mxu0 0.0
        %1340 = vmatprep.subr.mxu0 0.0
        %1341 = vmatpush1.msra.mxu0 0.0
        %1342 = vmatprep.subr.mxu0 0.0
        %1343 = vmatpush1.msra.mxu0 0.0
        %1344 = vmatprep.subr.mxu0 0.0
        %1345 = vmatpush1.msra.mxu0 0.0
        %1346 = vmatprep.subr.mxu0 0.0
        %1347 = vmatpush1.msra.mxu0 %v1317
        %1348 = vmatprep.subr.mxu0 0.0
        %1349 = vmatpush1.msra.mxu0 %v1316
        %1350 = vmatprep.subr.mxu0 0.0
        %1351 = vmatpush1.msra.mxu0 %v1315
        %1352 = vmatprep.subr.mxu0 0.0
        %1353 = vmatpush1.msra.mxu0 %v1314
        %1354 = vmatprep.subr.mxu0 0.0
        %1355 = vmatpush2.msra.mxu0 0.0
        %1356 = vmatprep.subr.mxu0 0.0
        %1357 = vmatpush2.msra.mxu0 0.0
        %1358 = vmatprep.subr.mxu0 0.0
        %1359 = vmatpush2.msra.mxu0 0.0
        %1360 = vmatprep.subr.mxu0 0.0
        %1361 = vmatpush2.msra.mxu0 0.0
        %1362 = vmatprep.subr.mxu0 0.0
        %1363 = vmatpush2.msra.mxu0 0.0
        %1364 = vmatprep.subr.mxu0 0.0
        %1365 = vmatpush2.msra.mxu0 0.0
        %1366 = vmatprep.subr.mxu0 0.0
        %1367 = vmatpush2.msra.mxu0 0.0
        %1368 = vmatprep.subr.mxu0 0.0
        %1369 = vmatpush2.msra.mxu0 0.0
        %1370 = vmatprep.subr.mxu0 0.0
        %1371 = vmatpush2.msra.mxu0 0.0
        %1372 = vmatprep.subr.mxu0 0.0
        %1373 = vmatpush2.msra.mxu0 0.0
        %1374 = vmatprep.subr.mxu0 0.0
        %1375 = vmatpush2.msra.mxu0 0.0
        %1376 = vmatprep.subr.mxu0 0.0
        %1377 = vmatpush2.msra.mxu0 0.0
        %1378 = vmatprep.subr.mxu0 0.0
        %1379 = vmatpush2.msra.mxu0 0.0
        %1380 = vmatprep.subr.mxu0 0.0
        %1381 = vmatpush2.msra.mxu0 0.0
        %1382 = vmatprep.subr.mxu0 0.0
        %1383 = vmatpush2.msra.mxu0 0.0
        %1384 = vmatprep.subr.mxu0 0.0
        %1385 = vmatpush2.msra.mxu0 0.0
        %1386 = vmatprep.mubr.f32.mxu0 0.0
        %1387 = vmatmul.mubr.f32.gmra.mxu0 %v571
        %v1388 = vpop.f32.mrf.mxu0
        %v1389 = vadd.f32 %v1320, %v1388
        %v1390 = vpop.f32.mrf.mxu0
        %1391 = vmatprep.mubr.f32.mxu0 0.0
        %1392 = vmatmul.mubr.f32.gmra.mxu0 %v574
        %v1393 = vpop.f32.mrf.mxu0
        %v1394 = vadd.f32 %v1320, %v1393
        %v1395 = vpop.f32.mrf.mxu0
        %1396 = vdwg.mxu0
        %v1398 = vsel %vm819, %v1227, 0
        %v1401 = vsel %vm819, %v1305, 0
        %1403 = vmatprep.subr.mxu0 0.0
        %1404 = vmatpush1.xpose.msra.mxu0 0.0
        %1405 = vmatprep.subr.mxu0 0.0
        %1406 = vmatpush1.xpose.msra.mxu0 0.0
        %1407 = vmatprep.subr.mxu0 0.0
        %1408 = vmatpush1.xpose.msra.mxu0 0.0
        %1409 = vmatprep.subr.mxu0 0.0
        %1410 = vmatpush1.xpose.msra.mxu0 0.0
        %1411 = vmatprep.subr.mxu0 0.0
        %1412 = vmatpush1.xpose.msra.mxu0 0.0
        %1413 = vmatprep.subr.mxu0 0.0
        %1414 = vmatpush1.xpose.msra.mxu0 0.0
        %1415 = vmatprep.subr.mxu0 0.0
        %1416 = vmatpush1.xpose.msra.mxu0 0.0
        %1417 = vmatprep.subr.mxu0 0.0
        %1418 = vmatpush1.xpose.msra.mxu0 0.0
        %1419 = vmatprep.subr.mxu0 0.0
        %1420 = vmatpush1.xpose.msra.mxu0 0.0
        %1421 = vmatprep.subr.mxu0 0.0
        %1422 = vmatpush1.xpose.msra.mxu0 0.0
        %1423 = vmatprep.subr.mxu0 0.0
        %1424 = vmatpush1.xpose.msra.mxu0 0.0
        %1425 = vmatprep.subr.mxu0 0.0
        %1426 = vmatpush1.xpose.msra.mxu0 0.0
        %1427 = vmatprep.subr.mxu0 0.0
        %1428 = vmatpush1.xpose.msra.mxu0 0.0
        %1429 = vmatprep.subr.mxu0 0.0
        %1430 = vmatpush1.xpose.msra.mxu0 0.0
        %1431 = vmatprep.subr.mxu0 0.0
        %1432 = vmatpush1.xpose.msra.mxu0 0.0
        %1433 = vmatprep.subr.mxu0 0.0
        %1434 = vmatpush1.xpose.msra.mxu0 %v1401
        %1435 = vmatprep.subr.mxu0 0.0
        %1436 = vmatpush2.xpose.msra.mxu0 0.0
        %1437 = vmatprep.subr.mxu0 0.0
        %1438 = vmatpush2.xpose.msra.mxu0 0.0
        %1439 = vmatprep.subr.mxu0 0.0
        %1440 = vmatpush2.xpose.msra.mxu0 0.0
        %1441 = vmatprep.subr.mxu0 0.0
        %1442 = vmatpush2.xpose.msra.mxu0 0.0
        %1443 = vmatprep.subr.mxu0 0.0
        %1444 = vmatpush2.xpose.msra.mxu0 0.0
        %1445 = vmatprep.subr.mxu0 0.0
        %1446 = vmatpush2.xpose.msra.mxu0 0.0
        %1447 = vmatprep.subr.mxu0 0.0
        %1448 = vmatpush2.xpose.msra.mxu0 0.0
        %1449 = vmatprep.subr.mxu0 0.0
        %1450 = vmatpush2.xpose.msra.mxu0 0.0
        %1451 = vmatprep.subr.mxu0 0.0
        %1452 = vmatpush2.xpose.msra.mxu0 0.0
        %1453 = vmatprep.subr.mxu0 0.0
        %1454 = vmatpush2.xpose.msra.mxu0 0.0
        %1455 = vmatprep.subr.mxu0 0.0
        %1456 = vmatpush2.xpose.msra.mxu0 0.0
        %1457 = vmatprep.subr.mxu0 0.0
        %1458 = vmatpush2.xpose.msra.mxu0 0.0
        %1459 = vmatprep.subr.mxu0 0.0
        %1460 = vmatpush2.xpose.msra.mxu0 0.0
        %1461 = vmatprep.subr.mxu0 0.0
        %1462 = vmatpush2.xpose.msra.mxu0 0.0
        %1463 = vmatprep.subr.mxu0 0.0
        %1464 = vmatpush2.xpose.msra.mxu0 0.0
        %1465 = vmatprep.subr.mxu0 0.0
        %1466 = vmatpush2.xpose.msra.mxu0 0.0
        %1467 = vmatprep.mubr.f32.mxu0 0.0
        %1468 = vmatmul.mubr.f32.gmra.mxu0 %v1398
        %v1469 = vpop.f32.mrf.mxu0
        %v1470 = vadd.f32 %v521, %v1469
        %v1471 = vpop.f32.mrf.mxu0
        %1472 = vdwg.mxu0
        %v1474 = vsel %vm819, %v1228, 0
        %v1477 = vsel %vm819, %v1310, 0
        %1479 = vmatprep.subr.mxu0 0.0
        %1480 = vmatpush1.xpose.msra.mxu0 0.0
        %1481 = vmatprep.subr.mxu0 0.0
        %1482 = vmatpush1.xpose.msra.mxu0 0.0
        %1483 = vmatprep.subr.mxu0 0.0
        %1484 = vmatpush1.xpose.msra.mxu0 0.0
        %1485 = vmatprep.subr.mxu0 0.0
        %1486 = vmatpush1.xpose.msra.mxu0 0.0
        %1487 = vmatprep.subr.mxu0 0.0
        %1488 = vmatpush1.xpose.msra.mxu0 0.0
        %1489 = vmatprep.subr.mxu0 0.0
        %1490 = vmatpush1.xpose.msra.mxu0 0.0
        %1491 = vmatprep.subr.mxu0 0.0
        %1492 = vmatpush1.xpose.msra.mxu0 0.0
        %1493 = vmatprep.subr.mxu0 0.0
        %1494 = vmatpush1.xpose.msra.mxu0 0.0
        %1495 = vmatprep.subr.mxu0 0.0
        %1496 = vmatpush1.xpose.msra.mxu0 0.0
        %1497 = vmatprep.subr.mxu0 0.0
        %1498 = vmatpush1.xpose.msra.mxu0 0.0
        %1499 = vmatprep.subr.mxu0 0.0
        %1500 = vmatpush1.xpose.msra.mxu0 0.0
        %1501 = vmatprep.subr.mxu0 0.0
        %1502 = vmatpush1.xpose.msra.mxu0 0.0
        %1503 = vmatprep.subr.mxu0 0.0
        %1504 = vmatpush1.xpose.msra.mxu0 0.0
        %1505 = vmatprep.subr.mxu0 0.0
        %1506 = vmatpush1.xpose.msra.mxu0 0.0
        %1507 = vmatprep.subr.mxu0 0.0
        %1508 = vmatpush1.xpose.msra.mxu0 0.0
        %1509 = vmatprep.subr.mxu0 0.0
        %1510 = vmatpush1.xpose.msra.mxu0 %v1477
        %1511 = vmatprep.subr.mxu0 0.0
        %1512 = vmatpush2.xpose.msra.mxu0 0.0
        %1513 = vmatprep.subr.mxu0 0.0
        %1514 = vmatpush2.xpose.msra.mxu0 0.0
        %1515 = vmatprep.subr.mxu0 0.0
        %1516 = vmatpush2.xpose.msra.mxu0 0.0
        %1517 = vmatprep.subr.mxu0 0.0
        %1518 = vmatpush2.xpose.msra.mxu0 0.0
        %1519 = vmatprep.subr.mxu0 0.0
        %1520 = vmatpush2.xpose.msra.mxu0 0.0
        %1521 = vmatprep.subr.mxu0 0.0
        %1522 = vmatpush2.xpose.msra.mxu0 0.0
        %1523 = vmatprep.subr.mxu0 0.0
        %1524 = vmatpush2.xpose.msra.mxu0 0.0
        %1525 = vmatprep.subr.mxu0 0.0
        %1526 = vmatpush2.xpose.msra.mxu0 0.0
        %1527 = vmatprep.subr.mxu0 0.0
        %1528 = vmatpush2.xpose.msra.mxu0 0.0
        %1529 = vmatprep.subr.mxu0 0.0
        %1530 = vmatpush2.xpose.msra.mxu0 0.0
        %1531 = vmatprep.subr.mxu0 0.0
        %1532 = vmatpush2.xpose.msra.mxu0 0.0
        %1533 = vmatprep.subr.mxu0 0.0
        %1534 = vmatpush2.xpose.msra.mxu0 0.0
        %1535 = vmatprep.subr.mxu0 0.0
        %1536 = vmatpush2.xpose.msra.mxu0 0.0
        %1537 = vmatprep.subr.mxu0 0.0
        %1538 = vmatpush2.xpose.msra.mxu0 0.0
        %1539 = vmatprep.subr.mxu0 0.0
        %1540 = vmatpush2.xpose.msra.mxu0 0.0
        %1541 = vmatprep.subr.mxu0 0.0
        %1542 = vmatpush2.xpose.msra.mxu0 0.0
        %1543 = vmatprep.mubr.f32.mxu0 0.0
        %1544 = vmatmul.mubr.f32.gmra.mxu0 %v1474
        %v1545 = vpop.f32.mrf.mxu0
        %v1546 = vadd.f32 %v521, %v1545
        %v1547 = vpop.f32.mrf.mxu0
        %1548 = vdwg.mxu0
        %v1549 = vsel %vm972, %v1470, -inf
        %1550 = vmax.xlane.f32.xlu0 %v1549
        %v1551 = vpop.xlane.xlu0 %1550
        %v1552 = vsel %vm972, %v1546, -inf
        %1553 = vmax.xlane.f32.xlu0 %v1552
        %v1554 = vpop.xlane.xlu0 %1553
        %v1555 = vsub.f32 %v1470, %v1551
        %v1556 = vsub.f32 %v1546, %v1554
        %v1557 = vmul.f32 %v1555, 1.442695
        %v1558 = vpow.pop %v1557
        %v1559 = vmul.f32 %v1556, 1.442695
        %v1560 = vpow.pop %v1559
        %v1561 = vsel %vm972, %v1558, 0.0
        %1562 = vadd.xlane.f32.xlu0 %v1561
        %v1563 = vpop.xlane.xlu0 %1562
        %v1564 = vsel %vm972, %v1560, 0.0
        %1565 = vadd.xlane.f32.xlu0 %v1564
        %v1566 = vpop.xlane.xlu0 %1565
        %v1567 = vrcp.pop %v1563
        %v1568 = vrcp.pop %v1566
        %v1569 = vmul.f32 %v1558, %v1567
        %v1570 = vmul.f32 %v1560, %v1568
        %v1572 = vsel %vm972, %v1569, 0
        %1574 = vmatprep.subr.mxu0 0.0
        %1575 = vmatpush1.msra.mxu0 0.0
        %1576 = vmatprep.subr.mxu0 0.0
        %1577 = vmatpush1.msra.mxu0 0.0
        %1578 = vmatprep.subr.mxu0 0.0
        %1579 = vmatpush1.msra.mxu0 0.0
        %1580 = vmatprep.subr.mxu0 0.0
        %1581 = vmatpush1.msra.mxu0 0.0
        %1582 = vmatprep.subr.mxu0 0.0
        %1583 = vmatpush1.msra.mxu0 0.0
        %1584 = vmatprep.subr.mxu0 0.0
        %1585 = vmatpush1.msra.mxu0 0.0
        %1586 = vmatprep.subr.mxu0 0.0
        %1587 = vmatpush1.msra.mxu0 0.0
        %1588 = vmatprep.subr.mxu0 0.0
        %1589 = vmatpush1.msra.mxu0 0.0
        %1590 = vmatprep.subr.mxu0 0.0
        %1591 = vmatpush1.msra.mxu0 0.0
        %1592 = vmatprep.subr.mxu0 0.0
        %1593 = vmatpush1.msra.mxu0 0.0
        %1594 = vmatprep.subr.mxu0 0.0
        %1595 = vmatpush1.msra.mxu0 0.0
        %1596 = vmatprep.subr.mxu0 0.0
        %1597 = vmatpush1.msra.mxu0 0.0
        %1598 = vmatprep.subr.mxu0 0.0
        %1599 = vmatpush1.msra.mxu0 0.0
        %1600 = vmatprep.subr.mxu0 0.0
        %1601 = vmatpush1.msra.mxu0 0.0
        %1602 = vmatprep.subr.mxu0 0.0
        %1603 = vmatpush1.msra.mxu0 0.0
        %1604 = vmatprep.subr.mxu0 0.0
        %1605 = vmatpush1.msra.mxu0 %v1389
        %1606 = vmatprep.subr.mxu0 0.0
        %1607 = vmatpush2.msra.mxu0 0.0
        %1608 = vmatprep.subr.mxu0 0.0
        %1609 = vmatpush2.msra.mxu0 0.0
        %1610 = vmatprep.subr.mxu0 0.0
        %1611 = vmatpush2.msra.mxu0 0.0
        %1612 = vmatprep.subr.mxu0 0.0
        %1613 = vmatpush2.msra.mxu0 0.0
        %1614 = vmatprep.subr.mxu0 0.0
        %1615 = vmatpush2.msra.mxu0 0.0
        %1616 = vmatprep.subr.mxu0 0.0
        %1617 = vmatpush2.msra.mxu0 0.0
        %1618 = vmatprep.subr.mxu0 0.0
        %1619 = vmatpush2.msra.mxu0 0.0
        %1620 = vmatprep.subr.mxu0 0.0
        %1621 = vmatpush2.msra.mxu0 0.0
        %1622 = vmatprep.subr.mxu0 0.0
        %1623 = vmatpush2.msra.mxu0 0.0
        %1624 = vmatprep.subr.mxu0 0.0
        %1625 = vmatpush2.msra.mxu0 0.0
        %1626 = vmatprep.subr.mxu0 0.0
        %1627 = vmatpush2.msra.mxu0 0.0
        %1628 = vmatprep.subr.mxu0 0.0
        %1629 = vmatpush2.msra.mxu0 0.0
        %1630 = vmatprep.subr.mxu0 0.0
        %1631 = vmatpush2.msra.mxu0 0.0
        %1632 = vmatprep.subr.mxu0 0.0
        %1633 = vmatpush2.msra.mxu0 0.0
        %1634 = vmatprep.subr.mxu0 0.0
        %1635 = vmatpush2.msra.mxu0 0.0
        %1636 = vmatprep.subr.mxu0 0.0
        %1637 = vmatpush2.msra.mxu0 0.0
        %1638 = vmatprep.mubr.f32.mxu0 0.0
        %1639 = vmatmul.mubr.f32.gmra.mxu0 %v1572
        %v1640 = vpop.f32.mrf.mxu0
        %v1641 = vadd.f32 0.0, %v1640
        %v1642 = vpop.f32.mrf.mxu0
        %1643 = vdwg.mxu0
        %v1645 = vsel %vm972, %v1570, 0
        %1647 = vmatprep.subr.mxu0 0.0
        %1648 = vmatpush1.msra.mxu0 0.0
        %1649 = vmatprep.subr.mxu0 0.0
        %1650 = vmatpush1.msra.mxu0 0.0
        %1651 = vmatprep.subr.mxu0 0.0
        %1652 = vmatpush1.msra.mxu0 0.0
        %1653 = vmatprep.subr.mxu0 0.0
        %1654 = vmatpush1.msra.mxu0 0.0
        %1655 = vmatprep.subr.mxu0 0.0
        %1656 = vmatpush1.msra.mxu0 0.0
        %1657 = vmatprep.subr.mxu0 0.0
        %1658 = vmatpush1.msra.mxu0 0.0
        %1659 = vmatprep.subr.mxu0 0.0
        %1660 = vmatpush1.msra.mxu0 0.0
        %1661 = vmatprep.subr.mxu0 0.0
        %1662 = vmatpush1.msra.mxu0 0.0
        %1663 = vmatprep.subr.mxu0 0.0
        %1664 = vmatpush1.msra.mxu0 0.0
        %1665 = vmatprep.subr.mxu0 0.0
        %1666 = vmatpush1.msra.mxu0 0.0
        %1667 = vmatprep.subr.mxu0 0.0
        %1668 = vmatpush1.msra.mxu0 0.0
        %1669 = vmatprep.subr.mxu0 0.0
        %1670 = vmatpush1.msra.mxu0 0.0
        %1671 = vmatprep.subr.mxu0 0.0
        %1672 = vmatpush1.msra.mxu0 0.0
        %1673 = vmatprep.subr.mxu0 0.0
        %1674 = vmatpush1.msra.mxu0 0.0
        %1675 = vmatprep.subr.mxu0 0.0
        %1676 = vmatpush1.msra.mxu0 0.0
        %1677 = vmatprep.subr.mxu0 0.0
        %1678 = vmatpush1.msra.mxu0 %v1394
        %1679 = vmatprep.subr.mxu0 0.0
        %1680 = vmatpush2.msra.mxu0 0.0
        %1681 = vmatprep.subr.mxu0 0.0
        %1682 = vmatpush2.msra.mxu0 0.0
        %1683 = vmatprep.subr.mxu0 0.0
        %1684 = vmatpush2.msra.mxu0 0.0
        %1685 = vmatprep.subr.mxu0 0.0
        %1686 = vmatpush2.msra.mxu0 0.0
        %1687 = vmatprep.subr.mxu0 0.0
        %1688 = vmatpush2.msra.mxu0 0.0
        %1689 = vmatprep.subr.mxu0 0.0
        %1690 = vmatpush2.msra.mxu0 0.0
        %1691 = vmatprep.subr.mxu0 0.0
        %1692 = vmatpush2.msra.mxu0 0.0
        %1693 = vmatprep.subr.mxu0 0.0
        %1694 = vmatpush2.msra.mxu0 0.0
        %1695 = vmatprep.subr.mxu0 0.0
        %1696 = vmatpush2.msra.mxu0 0.0
        %1697 = vmatprep.subr.mxu0 0.0
        %1698 = vmatpush2.msra.mxu0 0.0
        %1699 = vmatprep.subr.mxu0 0.0
        %1700 = vmatpush2.msra.mxu0 0.0
        %1701 = vmatprep.subr.mxu0 0.0
        %1702 = vmatpush2.msra.mxu0 0.0
        %1703 = vmatprep.subr.mxu0 0.0
        %1704 = vmatpush2.msra.mxu0 0.0
        %1705 = vmatprep.subr.mxu0 0.0
        %1706 = vmatpush2.msra.mxu0 0.0
        %1707 = vmatprep.subr.mxu0 0.0
        %1708 = vmatpush2.msra.mxu0 0.0
        %1709 = vmatprep.subr.mxu0 0.0
        %1710 = vmatpush2.msra.mxu0 0.0
        %1711 = vmatprep.mubr.f32.mxu0 0.0
        %1712 = vmatmul.mubr.f32.gmra.mxu0 %v1645
        %v1713 = vpop.f32.mrf.mxu0
        %v1714 = vadd.f32 0.0, %v1713
        %v1715 = vpop.f32.mrf.mxu0
        %1716 = vdwg.mxu0
        %s1717 = scalar_lea.vmem %s488, 16
        %v1718 = vld [vmem:[%s1717] sm:$0xff]
        %v1719 = vld [vmem:[%s1717 + $0x8] sm:$0xff]
        %v1721 = vsel %vm819, %v1641, 0
        %v1724 = vsel %vm819, %v1714, 0
        %1726 = vmatprep.subr.mxu0 0.0
        %1727 = vmatpush1.msra.mxu0 0.0
        %1728 = vmatprep.subr.mxu0 0.0
        %1729 = vmatpush1.msra.mxu0 0.0
        %1730 = vmatprep.subr.mxu0 0.0
        %1731 = vmatpush1.msra.mxu0 0.0
        %1732 = vmatprep.subr.mxu0 0.0
        %1733 = vmatpush1.msra.mxu0 0.0
        %1734 = vmatprep.subr.mxu0 0.0
        %1735 = vmatpush1.msra.mxu0 0.0
        %1736 = vmatprep.subr.mxu0 0.0
        %1737 = vmatpush1.msra.mxu0 0.0
        %1738 = vmatprep.subr.mxu0 0.0
        %1739 = vmatpush1.msra.mxu0 0.0
        %1740 = vmatprep.subr.mxu0 0.0
        %1741 = vmatpush1.msra.mxu0 0.0
        %1742 = vmatprep.subr.mxu0 0.0
        %1743 = vmatpush1.msra.mxu0 0.0
        %1744 = vmatprep.subr.mxu0 0.0
        %1745 = vmatpush1.msra.mxu0 0.0
        %1746 = vmatprep.subr.mxu0 0.0
        %1747 = vmatpush1.msra.mxu0 0.0
        %1748 = vmatprep.subr.mxu0 0.0
        %1749 = vmatpush1.msra.mxu0 0.0
        %1750 = vmatprep.subr.mxu0 0.0
        %1751 = vmatpush1.msra.mxu0 0.0
        %1752 = vmatprep.subr.mxu0 0.0
        %1753 = vmatpush1.msra.mxu0 0.0
        %1754 = vmatprep.subr.mxu0 0.0
        %1755 = vmatpush1.msra.mxu0 %v1719
        %1756 = vmatprep.subr.mxu0 0.0
        %1757 = vmatpush1.msra.mxu0 %v1718
        %1758 = vmatprep.subr.mxu0 0.0
        %1759 = vmatpush2.msra.mxu0 0.0
        %1760 = vmatprep.subr.mxu0 0.0
        %1761 = vmatpush2.msra.mxu0 0.0
        %1762 = vmatprep.subr.mxu0 0.0
        %1763 = vmatpush2.msra.mxu0 0.0
        %1764 = vmatprep.subr.mxu0 0.0
        %1765 = vmatpush2.msra.mxu0 0.0
        %1766 = vmatprep.subr.mxu0 0.0
        %1767 = vmatpush2.msra.mxu0 0.0
        %1768 = vmatprep.subr.mxu0 0.0
        %1769 = vmatpush2.msra.mxu0 0.0
        %1770 = vmatprep.subr.mxu0 0.0
        %1771 = vmatpush2.msra.mxu0 0.0
        %1772 = vmatprep.subr.mxu0 0.0
        %1773 = vmatpush2.msra.mxu0 0.0
        %1774 = vmatprep.subr.mxu0 0.0
        %1775 = vmatpush2.msra.mxu0 0.0
        %1776 = vmatprep.subr.mxu0 0.0
        %1777 = vmatpush2.msra.mxu0 0.0
        %1778 = vmatprep.subr.mxu0 0.0
        %1779 = vmatpush2.msra.mxu0 0.0
        %1780 = vmatprep.subr.mxu0 0.0
        %1781 = vmatpush2.msra.mxu0 0.0
        %1782 = vmatprep.subr.mxu0 0.0
        %1783 = vmatpush2.msra.mxu0 0.0
        %1784 = vmatprep.subr.mxu0 0.0
        %1785 = vmatpush2.msra.mxu0 0.0
        %1786 = vmatprep.subr.mxu0 0.0
        %1787 = vmatpush2.msra.mxu0 0.0
        %1788 = vmatprep.subr.mxu0 0.0
        %1789 = vmatpush2.msra.mxu0 0.0
        %1790 = vmatprep.mubr.f32.mxu0 0.0
        %1791 = vmatmul.mubr.f32.gmra.mxu0 %v1721
        %v1792 = vpop.f32.mrf.mxu0
        %v1793 = vadd.f32 0.0, %v1792
        %v1794 = vpop.f32.mrf.mxu0
        %1795 = vmatprep.mubr.f32.mxu0 0.0
        %1796 = vmatmul.mubr.f32.gmra.mxu0 %v1724
        %v1797 = vpop.f32.mrf.mxu0
        %v1798 = vadd.f32 0.0, %v1797
        %v1799 = vpop.f32.mrf.mxu0
        %1800 = vdwg.mxu0
        %v1802 = vsel %vm819, %v1065, 0
        %v1805 = vsel %vm819, %v1138, 0
        %1807 = vmatprep.subr.mxu0 0.0
        %1808 = vmatpush1.msra.mxu0 0.0
        %1809 = vmatprep.subr.mxu0 0.0
        %1810 = vmatpush1.msra.mxu0 0.0
        %1811 = vmatprep.subr.mxu0 0.0
        %1812 = vmatpush1.msra.mxu0 0.0
        %1813 = vmatprep.subr.mxu0 0.0
        %1814 = vmatpush1.msra.mxu0 0.0
        %1815 = vmatprep.subr.mxu0 0.0
        %1816 = vmatpush1.msra.mxu0 0.0
        %1817 = vmatprep.subr.mxu0 0.0
        %1818 = vmatpush1.msra.mxu0 0.0
        %1819 = vmatprep.subr.mxu0 0.0
        %1820 = vmatpush1.msra.mxu0 0.0
        %1821 = vmatprep.subr.mxu0 0.0
        %1822 = vmatpush1.msra.mxu0 0.0
        %1823 = vmatprep.subr.mxu0 0.0
        %1824 = vmatpush1.msra.mxu0 0.0
        %1825 = vmatprep.subr.mxu0 0.0
        %1826 = vmatpush1.msra.mxu0 0.0
        %1827 = vmatprep.subr.mxu0 0.0
        %1828 = vmatpush1.msra.mxu0 0.0
        %1829 = vmatprep.subr.mxu0 0.0
        %1830 = vmatpush1.msra.mxu0 0.0
        %1831 = vmatprep.subr.mxu0 0.0
        %1832 = vmatpush1.msra.mxu0 0.0
        %1833 = vmatprep.subr.mxu0 0.0
        %1834 = vmatpush1.msra.mxu0 0.0
        %1835 = vmatprep.subr.mxu0 0.0
        %1836 = vmatpush1.msra.mxu0 %v1142
        %1837 = vmatprep.subr.mxu0 0.0
        %1838 = vmatpush1.msra.mxu0 %v1141
        %1839 = vmatprep.subr.mxu0 0.0
        %1840 = vmatpush2.msra.mxu0 0.0
        %1841 = vmatprep.subr.mxu0 0.0
        %1842 = vmatpush2.msra.mxu0 0.0
        %1843 = vmatprep.subr.mxu0 0.0
        %1844 = vmatpush2.msra.mxu0 0.0
        %1845 = vmatprep.subr.mxu0 0.0
        %1846 = vmatpush2.msra.mxu0 0.0
        %1847 = vmatprep.subr.mxu0 0.0
        %1848 = vmatpush2.msra.mxu0 0.0
        %1849 = vmatprep.subr.mxu0 0.0
        %1850 = vmatpush2.msra.mxu0 0.0
        %1851 = vmatprep.subr.mxu0 0.0
        %1852 = vmatpush2.msra.mxu0 0.0
        %1853 = vmatprep.subr.mxu0 0.0
        %1854 = vmatpush2.msra.mxu0 0.0
        %1855 = vmatprep.subr.mxu0 0.0
        %1856 = vmatpush2.msra.mxu0 0.0
        %1857 = vmatprep.subr.mxu0 0.0
        %1858 = vmatpush2.msra.mxu0 0.0
        %1859 = vmatprep.subr.mxu0 0.0
        %1860 = vmatpush2.msra.mxu0 0.0
        %1861 = vmatprep.subr.mxu0 0.0
        %1862 = vmatpush2.msra.mxu0 0.0
        %1863 = vmatprep.subr.mxu0 0.0
        %1864 = vmatpush2.msra.mxu0 0.0
        %1865 = vmatprep.subr.mxu0 0.0
        %1866 = vmatpush2.msra.mxu0 0.0
        %1867 = vmatprep.subr.mxu0 0.0
        %1868 = vmatpush2.msra.mxu0 0.0
        %1869 = vmatprep.subr.mxu0 0.0
        %1870 = vmatpush2.msra.mxu0 0.0
        %1871 = vmatprep.mubr.f32.mxu0 0.0
        %1872 = vmatmul.mubr.f32.gmra.mxu0 %v1802
        %v1873 = vpop.f32.mrf.mxu0
        %v1874 = vadd.f32 %v1793, %v1873
        %v1875 = vpop.f32.mrf.mxu0
        %1876 = vmatprep.mubr.f32.mxu0 0.0
        %1877 = vmatmul.mubr.f32.gmra.mxu0 %v1805
        %v1878 = vpop.f32.mrf.mxu0
        %v1879 = vadd.f32 %v1798, %v1878
        %v1880 = vpop.f32.mrf.mxu0
        %1881 = vdwg.mxu0
        %v1882 = vadd.f32 %v516, %v1874
        %v1883 = vadd.f32 %v517, %v1879
        %v1884 = vlaneseq
        %v1885 = vshrl.u32 %v1884, 7
        %v1886 = vsub.s32 7, %v1885
        %v1887 = vrot.slane %v518, %v1886
        %v1888 = vadd.f32 %v1882, %v1887
        %v1889 = vadd.f32 %v1883, %v1887
        %v1890 = vsel %vm522, %v1888, 0.0
        %1891 = vadd.xlane.f32.xlu0 %v1890
        %v1892 = vpop.xlane.xlu0 %1891
        %v1893 = vsel %vm522, %v1889, 0.0
        %1894 = vadd.xlane.f32.xlu0 %v1893
        %v1895 = vpop.xlane.xlu0 %1894
        %v1896 = vmul.f32 %v1892, %v529
        %v1897 = vmul.f32 %v1895, %v529
        %v1898 = vsub.f32 %v1888, %v1896
        %v1899 = vsub.f32 %v1889, %v1897
        %v1900 = vmul.f32 %v1898, %v1898
        %v1901 = vmul.f32 %v1899, %v1899
        %v1902 = vsel %vm522, %v1900, 0.0
        %1903 = vadd.xlane.f32.xlu0 %v1902
        %v1904 = vpop.xlane.xlu0 %1903
        %v1905 = vsel %vm522, %v1901, 0.0
        %1906 = vadd.xlane.f32.xlu0 %v1905
        %v1907 = vpop.xlane.xlu0 %1906
        %v1908 = vmul.f32 %v1904, %v529
        %v1909 = vmul.f32 %v1907, %v529
        %v1910 = vadd.f32 %v1908, 1e-05
        %v1911 = vadd.f32 %v1909, 1e-05
        %v1912 = vrsqrt.pop %v1910
        %v1913 = vrsqrt.pop %v1911
        %v1914 = vmul.f32 %v1898, %v1912
        %v1915 = vmul.f32 %v1899, %v1913
        %v1916 = vlaneseq
        %v1917 = vshrl.u32 %v1916, 7
        %v1918 = vsub.s32 2, %v1917
        %v1919 = vrot.slane %v518, %v1918
        %v1920 = vmul.f32 %v1914, %v1919
        %v1921 = vmul.f32 %v1915, %v1919
        %v1922 = vlaneseq
        %v1923 = vshrl.u32 %v1922, 7
        %v1924 = vsub.s32 3, %v1923
        %v1925 = vrot.slane %v518, %v1924
        %v1926 = vadd.f32 %v1920, %v1925
        %v1927 = vadd.f32 %v1921, %v1925
        %v1928 = vld [vmem:[%s493] sm:$0xff]
        %v1929 = vld [vmem:[%s493 + $0x8] sm:$0xff]
        %v1930 = vld [vmem:[%s493 + $0x10] sm:$0xff]
        %v1931 = vld [vmem:[%s493 + $0x18] sm:$0xff]
        %v1933 = vlaneseq
        %v1934 = vshrl.u32 %v1933, 7
        %v1935 = vsub.s32 0, %v1934
        %v1936 = vrot.slane %v520, %v1935
        %v1939 = vsel %vm522, %v1926, 0
        %v1942 = vsel %vm522, %v1927, 0
        %1944 = vmatprep.subr.mxu0 0.0
        %1945 = vmatpush1.msra.mxu0 0.0
        %1946 = vmatprep.subr.mxu0 0.0
        %1947 = vmatpush1.msra.mxu0 0.0
        %1948 = vmatprep.subr.mxu0 0.0
        %1949 = vmatpush1.msra.mxu0 0.0
        %1950 = vmatprep.subr.mxu0 0.0
        %1951 = vmatpush1.msra.mxu0 0.0
        %1952 = vmatprep.subr.mxu0 0.0
        %1953 = vmatpush1.msra.mxu0 0.0
        %1954 = vmatprep.subr.mxu0 0.0
        %1955 = vmatpush1.msra.mxu0 0.0
        %1956 = vmatprep.subr.mxu0 0.0
        %1957 = vmatpush1.msra.mxu0 0.0
        %1958 = vmatprep.subr.mxu0 0.0
        %1959 = vmatpush1.msra.mxu0 0.0
        %1960 = vmatprep.subr.mxu0 0.0
        %1961 = vmatpush1.msra.mxu0 0.0
        %1962 = vmatprep.subr.mxu0 0.0
        %1963 = vmatpush1.msra.mxu0 0.0
        %1964 = vmatprep.subr.mxu0 0.0
        %1965 = vmatpush1.msra.mxu0 0.0
        %1966 = vmatprep.subr.mxu0 0.0
        %1967 = vmatpush1.msra.mxu0 0.0
        %1968 = vmatprep.subr.mxu0 0.0
        %1969 = vmatpush1.msra.mxu0 %v1931
        %1970 = vmatprep.subr.mxu0 0.0
        %1971 = vmatpush1.msra.mxu0 %v1930
        %1972 = vmatprep.subr.mxu0 0.0
        %1973 = vmatpush1.msra.mxu0 %v1929
        %1974 = vmatprep.subr.mxu0 0.0
        %1975 = vmatpush1.msra.mxu0 %v1928
        %1976 = vmatprep.subr.mxu0 0.0
        %1977 = vmatpush2.msra.mxu0 0.0
        %1978 = vmatprep.subr.mxu0 0.0
        %1979 = vmatpush2.msra.mxu0 0.0
        %1980 = vmatprep.subr.mxu0 0.0
        %1981 = vmatpush2.msra.mxu0 0.0
        %1982 = vmatprep.subr.mxu0 0.0
        %1983 = vmatpush2.msra.mxu0 0.0
        %1984 = vmatprep.subr.mxu0 0.0
        %1985 = vmatpush2.msra.mxu0 0.0
        %1986 = vmatprep.subr.mxu0 0.0
        %1987 = vmatpush2.msra.mxu0 0.0
        %1988 = vmatprep.subr.mxu0 0.0
        %1989 = vmatpush2.msra.mxu0 0.0
        %1990 = vmatprep.subr.mxu0 0.0
        %1991 = vmatpush2.msra.mxu0 0.0
        %1992 = vmatprep.subr.mxu0 0.0
        %1993 = vmatpush2.msra.mxu0 0.0
        %1994 = vmatprep.subr.mxu0 0.0
        %1995 = vmatpush2.msra.mxu0 0.0
        %1996 = vmatprep.subr.mxu0 0.0
        %1997 = vmatpush2.msra.mxu0 0.0
        %1998 = vmatprep.subr.mxu0 0.0
        %1999 = vmatpush2.msra.mxu0 0.0
        %2000 = vmatprep.subr.mxu0 0.0
        %2001 = vmatpush2.msra.mxu0 0.0
        %2002 = vmatprep.subr.mxu0 0.0
        %2003 = vmatpush2.msra.mxu0 0.0
        %2004 = vmatprep.subr.mxu0 0.0
        %2005 = vmatpush2.msra.mxu0 0.0
        %2006 = vmatprep.subr.mxu0 0.0
        %2007 = vmatpush2.msra.mxu0 0.0
        %2008 = vmatprep.mubr.f32.mxu0 0.0
        %2009 = vmatmul.mubr.f32.gmra.mxu0 %v1939
        %v2010 = vpop.f32.mrf.mxu0
        %v2011 = vadd.f32 %v1936, %v2010
        %v2012 = vpop.f32.mrf.mxu0
        %2013 = vmatprep.mubr.f32.mxu0 0.0
        %2014 = vmatmul.mubr.f32.gmra.mxu0 %v1942
        %v2015 = vpop.f32.mrf.mxu0
        %v2016 = vadd.f32 %v1936, %v2015
        %v2017 = vpop.f32.mrf.mxu0
        %2018 = vdwg.mxu0
        %v2019 = vmul.f32 %v2011, 1.702
        %v2020 = vmul.f32 %v2016, 1.702
        %v2021 = vxor.u32 %v2019, 2147483648
        %v2022 = vxor.u32 %v2020, 2147483648
        %v2023 = vmul.f32 %v2021, 1.442695
        %v2024 = vpow.pop %v2023
        %v2025 = vmul.f32 %v2022, 1.442695
        %v2026 = vpow.pop %v2025
        %v2027 = vadd.f32 %v2024, 1.0
        %v2028 = vadd.f32 %v2026, 1.0
        %v2029 = vrcp.pop %v2027
        %v2030 = vmul.f32 1.0, %v2029
        %v2031 = vrcp.pop %v2028
        %v2032 = vmul.f32 1.0, %v2031
        %v2033 = vmul.f32 %v2011, %v2030
        %v2034 = vmul.f32 %v2016, %v2032
        %v2035 = vld [vmem:[%s498] sm:$0xff]
        %v2036 = vld [vmem:[%s498 + $0x8] sm:$0xff]
        %v2037 = vld [vmem:[%s498 + $0x10] sm:$0xff]
        %v2038 = vld [vmem:[%s498 + $0x18] sm:$0xff]
        %v2039 = vld [vmem:[%s498 + $0x20] sm:$0xff]
        %v2040 = vld [vmem:[%s498 + $0x28] sm:$0xff]
        %v2041 = vld [vmem:[%s498 + $0x30] sm:$0xff]
        %v2042 = vld [vmem:[%s498 + $0x38] sm:$0xff]
        %v2043 = vld [vmem:[%s498 + $0x40] sm:$0xff]
        %v2044 = vld [vmem:[%s498 + $0x48] sm:$0xff]
        %v2045 = vld [vmem:[%s498 + $0x50] sm:$0xff]
        %v2046 = vld [vmem:[%s498 + $0x58] sm:$0xff]
        %v2047 = vld [vmem:[%s498 + $0x60] sm:$0xff]
        %v2048 = vld [vmem:[%s498 + $0x68] sm:$0xff]
        %v2049 = vld [vmem:[%s498 + $0x70] sm:$0xff]
        %v2050 = vld [vmem:[%s498 + $0x78] sm:$0xff]
        %2051 = vmatprep.subr.mxu0 0.0
        %2052 = vmatpush1.msra.mxu0 %v2050
        %2053 = vmatprep.subr.mxu0 0.0
        %2054 = vmatpush1.msra.mxu0 %v2049
        %2055 = vmatprep.subr.mxu0 0.0
        %2056 = vmatpush1.msra.mxu0 %v2048
        %2057 = vmatprep.subr.mxu0 0.0
        %2058 = vmatpush1.msra.mxu0 %v2047
        %2059 = vmatprep.subr.mxu0 0.0
        %2060 = vmatpush1.msra.mxu0 %v2046
        %2061 = vmatprep.subr.mxu0 0.0
        %2062 = vmatpush1.msra.mxu0 %v2045
        %2063 = vmatprep.subr.mxu0 0.0
        %2064 = vmatpush1.msra.mxu0 %v2044
        %2065 = vmatprep.subr.mxu0 0.0
        %2066 = vmatpush1.msra.mxu0 %v2043
        %2067 = vmatprep.subr.mxu0 0.0
        %2068 = vmatpush1.msra.mxu0 %v2042
        %2069 = vmatprep.subr.mxu0 0.0
        %2070 = vmatpush1.msra.mxu0 %v2041
        %2071 = vmatprep.subr.mxu0 0.0
        %2072 = vmatpush1.msra.mxu0 %v2040
        %2073 = vmatprep.subr.mxu0 0.0
        %2074 = vmatpush1.msra.mxu0 %v2039
        %2075 = vmatprep.subr.mxu0 0.0
        %2076 = vmatpush1.msra.mxu0 %v2038
        %2077 = vmatprep.subr.mxu0 0.0
        %2078 = vmatpush1.msra.mxu0 %v2037
        %2079 = vmatprep.subr.mxu0 0.0
        %2080 = vmatpush1.msra.mxu0 %v2036
        %2081 = vmatprep.subr.mxu0 0.0
        %2082 = vmatpush1.msra.mxu0 %v2035
        %2083 = vmatprep.subr.mxu0 0.0
        %2084 = vmatpush2.msra.mxu0 0.0
        %2085 = vmatprep.subr.mxu0 0.0
        %2086 = vmatpush2.msra.mxu0 0.0
        %2087 = vmatprep.subr.mxu0 0.0
        %2088 = vmatpush2.msra.mxu0 0.0
        %2089 = vmatprep.subr.mxu0 0.0
        %2090 = vmatpush2.msra.mxu0 0.0
        %2091 = vmatprep.subr.mxu0 0.0
        %2092 = vmatpush2.msra.mxu0 0.0
        %2093 = vmatprep.subr.mxu0 0.0
        %2094 = vmatpush2.msra.mxu0 0.0
        %2095 = vmatprep.subr.mxu0 0.0
        %2096 = vmatpush2.msra.mxu0 0.0
        %2097 = vmatprep.subr.mxu0 0.0
        %2098 = vmatpush2.msra.mxu0 0.0
        %2099 = vmatprep.subr.mxu0 0.0
        %2100 = vmatpush2.msra.mxu0 0.0
        %2101 = vmatprep.subr.mxu0 0.0
        %2102 = vmatpush2.msra.mxu0 0.0
        %2103 = vmatprep.subr.mxu0 0.0
        %2104 = vmatpush2.msra.mxu0 0.0
        %2105 = vmatprep.subr.mxu0 0.0
        %2106 = vmatpush2.msra.mxu0 0.0
        %2107 = vmatprep.subr.mxu0 0.0
        %2108 = vmatpush2.msra.mxu0 0.0
        %2109 = vmatprep.subr.mxu0 0.0
        %2110 = vmatpush2.msra.mxu0 0.0
        %2111 = vmatprep.subr.mxu0 0.0
        %2112 = vmatpush2.msra.mxu0 0.0
        %2113 = vmatprep.subr.mxu0 0.0
        %2114 = vmatpush2.msra.mxu0 0.0
        %2115 = vmatprep.mubr.f32.mxu0 0.0
        %2116 = vmatmul.mubr.f32.gmra.mxu0 %v2033
        %v2117 = vpop.f32.mrf.mxu0
        %v2118 = vadd.f32 0.0, %v2117
        %v2119 = vpop.f32.mrf.mxu0
        %2120 = vmatprep.mubr.f32.mxu0 0.0
        %2121 = vmatmul.mubr.f32.gmra.mxu0 %v2034
        %v2122 = vpop.f32.mrf.mxu0
        %v2123 = vadd.f32 0.0, %v2122
        %v2124 = vpop.f32.mrf.mxu0
        %2125 = vdwg.mxu0
        %v2126 = vadd.f32 %v1888, %v2118
        %v2127 = vadd.f32 %v1889, %v2123
        %v2128 = vlaneseq
        %v2129 = vshrl.u32 %v2128, 7
        %v2130 = vsub.s32 0, %v2129
        %v2131 = vrot.slane %v519, %v2130
        %v2132 = vadd.f32 %v2126, %v2131
        %v2133 = vadd.f32 %v2127, %v2131
        %2134 = vst.msk [vmem:[#allocation2] sm:$0xff] %vm522, %v2132
        %2135 = vst.msk [vmem:[#allocation2 + $0x8] sm:$0xff] %vm522, %v2133
        %p2136 = scmp.eq.s32.totalorder %s23, 1
        // Predicated region
        $region69: #{frozen_clip_embedder_forward.1} parent=63 // pred_check
          %p2137 = pneg %p2136
        $region70: #{frozen_clip_embedder_forward.1} parent=63 // pred_check_branch
          %2139 = sbr.rel (%p2137) target = $region72
        $region71: #{frozen_clip_embedder_forward.1} parent=63 // pred_region
          %v2140 = vld [vmem:[%s10] sm:$0x1]
          %v2141 = vld [vmem:[%s10 + $0x1] sm:$0x1]
          %v2142 = vsel %vm522, %v2132, 0.0
          %2143 = vadd.xlane.f32.xlu0 %v2142
          %v2144 = vpop.xlane.xlu0 %2143
          %v2145 = vsel %vm522, %v2133, 0.0
          %2146 = vadd.xlane.f32.xlu0 %v2145
          %v2147 = vpop.xlane.xlu0 %2146
          %v2148 = vmul.f32 %v2144, %v529
          %v2149 = vmul.f32 %v2147, %v529
          %v2150 = vsub.f32 %v2132, %v2148
          %v2151 = vsub.f32 %v2133, %v2149
          %v2152 = vmul.f32 %v2150, %v2150
          %v2153 = vmul.f32 %v2151, %v2151
          %v2154 = vsel %vm522, %v2152, 0.0
          %2155 = vadd.xlane.f32.xlu0 %v2154
          %v2156 = vpop.xlane.xlu0 %2155
          %v2157 = vsel %vm522, %v2153, 0.0
          %2158 = vadd.xlane.f32.xlu0 %v2157
          %v2159 = vpop.xlane.xlu0 %2158
          %v2160 = vmul.f32 %v2156, %v529
          %v2161 = vmul.f32 %v2159, %v529
          %v2162 = vadd.f32 %v2160, 1e-05
          %v2163 = vadd.f32 %v2161, 1e-05
          %v2164 = vrsqrt.pop %v2162
          %v2165 = vrsqrt.pop %v2163
          %v2166 = vmul.f32 %v2150, %v2164
          %v2167 = vmul.f32 %v2151, %v2165
          %v2168 = vlaneseq
          %v2169 = vshrl.u32 %v2168, 7
          %v2170 = vsub.s32 0, %v2169
          %v2171 = vrot.slane %v2140, %v2170
          %v2172 = vmul.f32 %v2166, %v2171
          %v2173 = vmul.f32 %v2167, %v2171
          %v2174 = vlaneseq
          %v2175 = vshrl.u32 %v2174, 7
          %v2176 = vsub.s32 0, %v2175
          %v2177 = vrot.slane %v2141, %v2176
          %v2178 = vadd.f32 %v2172, %v2177
          %v2179 = vadd.f32 %v2173, %v2177
          %2180 = vst.msk [vmem:[#allocation3] sm:$0xff] %vm522, %v2178
          %2181 = vst.msk [vmem:[#allocation3 + $0x8] sm:$0xff] %vm522, %v2179
        $region72: #{frozen_clip_embedder_forward.1} parent=63 // pred_fallthru
          _
        // Predicated region
        $region73: #{frozen_clip_embedder_forward.1} parent=63 // pred_check
          %p2182 = pneg %p307
        $region74: #{frozen_clip_embedder_forward.1} parent=63 // pred_check_branch
          %2184 = sbr.rel (%p2182) target = $region76
        $region75: #{frozen_clip_embedder_forward.1} parent=63 // pred_region
          %s2186 = ssub.s32 256, 256
          %2187 = vsyncadd [#allocation4], %s2186
          %s2188 = sshll.u32 [#allocation3], 4
          %s2189 = int_to_ptr.vmem [resolvable:$true] %s2188
          %2194 = dma.vmem_to_hbm [thread:$0]  %s2189, 256, %s11, [#allocation4], 128, 128, 8
        $region76: #{frozen_clip_embedder_forward.1} parent=63 // pred_fallthru
          _
        // Predicated region
        $region77: #{frozen_clip_embedder_forward.1} parent=63 // pred_check
          %p2195 = pneg %p307
        $region78: #{frozen_clip_embedder_forward.1} parent=63 // pred_check_branch
          %2197 = sbr.rel (%p2195) target = $region80
        $region79: #{frozen_clip_embedder_forward.1} parent=63 // pred_region
          %2198 = dma.done [#allocation4], 256
        $region80: #{frozen_clip_embedder_forward.1} parent=63 // pred_fallthru
          _
      $region64: #{frozen_clip_embedder_forward.1} parent=5 // pred_fallthru
        _
      %p2199 = scmp.le.s32.totalorder 2, %s18
      // Predicated region
      $region81: #{frozen_clip_embedder_forward.1} parent=5 // pred_check
        %p2200 = pneg %p2199
      $region82: #{frozen_clip_embedder_forward.1} parent=5 // pred_check_branch
        %2202 = sbr.rel (%p2200) target = $region84
      $region83: #{frozen_clip_embedder_forward.1} parent=5 // pred_region
        %s2203 = ssub.s32 %s18, 2
      $region84: #{frozen_clip_embedder_forward.1} parent=5 // pred_fallthru
        _
    $region6: #{frozen_clip_embedder_forward.1} parent=1 // loop_footer
      %s22 = sadd.s32 1, %s18
    $region7: #{frozen_clip_embedder_forward.1} parent=1 // loop_footer_branch
      %17 = sbr.rel target = $region3
    $region8: #{frozen_clip_embedder_forward.1} parent=1 // loop_exit
      _
    %2204 = vsyncpa [#allocation4], 1
    %s2205 = scalar_lea.sflag [#allocation4], 1
    %2206 = vsyncpa %s2205, 1

</llo_original>
